<compile_context>
chip_gen: v7x
topology: tpu7x:2x2x1
jax: 0.10.0
libtpu: 0.0.40
codegen_flags: <defaults>
</compile_context>

<pallas_src>
import jax
import jax.numpy as jnp
from jax.experimental import pallas as pl
from jax.experimental.pallas import tpu as pltpu

WINDOW_SIZE = 200
H1 = 256
H2 = 512
OUT = 21 * 2          # 42
OUT_PAD = 128         # lane-dense output width; wrapper slices [:, :OUT]
MAX_TB = 1024         # batch tile target (per-step overhead << per-tile compute)


def _round_up(n, m):
    return ((n + m - 1) // m) * m


def _mlp_kernel(x_ref, w1_ref, b1_ref, w2_ref, b2_ref, w3_ref, b3_ref, o_ref):
    # One batch tile per grid step.  Weight/bias BlockSpecs have constant
    # index_maps, so they are DMA'd once and stay resident in VMEM.
    x = x_ref[...].astype(jnp.bfloat16)                               # [tb, 200]

    h1 = jnp.dot(x, w1_ref[...], preferred_element_type=jnp.float32)  # [tb, 256] f32
    h1 = jnp.maximum(h1 + b1_ref[...], 0.0)                           # ReLU
    # Dropout(p=0.2): identity in eval mode.
    # TODO(synk): training-mode dropout (pltpu.prng_random_bits mask) not implemented.

    h2 = jnp.dot(h1.astype(jnp.bfloat16), w2_ref[...],
                 preferred_element_type=jnp.float32)                  # [tb, 512] f32
    h2 = jnp.maximum(h2 + b2_ref[...], 0.0)                           # ReLU

    y = jnp.dot(h2.astype(jnp.bfloat16), w3_ref[...],
                preferred_element_type=jnp.float32)                   # [tb, 128] f32
    o_ref[...] = (y + b3_ref[...]).astype(o_ref.dtype)


def init_params(key):
    """Deterministic synthetic init matching nn.Linear shapes.

    Weights stored as [in, out] (transpose of PyTorch's [out, in]) so the
    kernel computes x @ W directly.
    """
    k1, k2, k3, k4, k5, k6 = jax.random.split(key, 6)

    def lin(kw, kb, fan_in, fan_out):
        bound = 1.0 / jnp.sqrt(fan_in)
        w = jax.random.uniform(kw, (fan_in, fan_out), jnp.float32, -bound, bound)
        b = jax.random.uniform(kb, (1, fan_out), jnp.float32, -bound, bound)
        return w, b

    w1, b1 = lin(k1, k2, WINDOW_SIZE, H1)
    w2, b2 = lin(k3, k4, H1, H2)
    w3, b3 = lin(k5, k6, H2, OUT)
    return (w1, b1, w2, b2, w3, b3)


def prepare_params(params):
    """Cast weights to bf16 and pad the last layer to 128 lanes (done once)."""
    w1, b1, w2, b2, w3, b3 = params
    w3p = jnp.zeros((H2, OUT_PAD), jnp.float32).at[:, :OUT].set(w3)
    b3p = jnp.zeros((1, OUT_PAD), jnp.float32).at[:, :OUT].set(b3)
    return (w1.astype(jnp.bfloat16), b1.astype(jnp.float32),
            w2.astype(jnp.bfloat16), b2.astype(jnp.float32),
            w3p.astype(jnp.bfloat16), b3p.astype(jnp.float32))


def _choose_tiles(B):
    """Balanced batch tiling: minimal padding, >= 2 tiles for v7x megacore."""
    n_tiles = pl.cdiv(B, MAX_TB)
    if n_tiles < 2 and B > 16:
        n_tiles = 2                       # keep both v7x TensorCores busy
    tb = _round_up(pl.cdiv(B, n_tiles), 8)
    return tb, n_tiles, tb * n_tiles


def _build_specs(tb, buffered_weights):
    # Resident weights/biases: constant index_map => single DMA.  Buffered(1)
    # drops the useless second buffer copy / per-step descriptor work.
    pm = pl.Buffered(1) if buffered_weights else None

    def wspec(shape):
        return pl.BlockSpec(shape, lambda i: (0, 0), pipeline_mode=pm)

    in_specs = [
        pl.BlockSpec((tb, WINDOW_SIZE), lambda i: (i, 0)),  # x tile (f32, un-padded K)
        wspec((WINDOW_SIZE, H1)),                           # w1
        wspec((1, H1)),                                     # b1
        wspec((H1, H2)),                                    # w2
        wspec((1, H2)),                                     # b2
        wspec((H2, OUT_PAD)),                               # w3
        wspec((1, OUT_PAD)),                                # b3
    ]
    out_spec = pl.BlockSpec((tb, OUT_PAD), lambda i: (i, 0))
    return in_specs, out_spec


def _run_pallas(xp, prepared, tb, n_tiles, buffered_weights):
    w1, b1, w2, b2, w3, b3 = prepared
    B_pad = xp.shape[0]
    in_specs, out_spec = _build_specs(tb, buffered_weights)

    flops = 2 * B_pad * (WINDOW_SIZE * H1 + H1 * H2 + H2 * OUT_PAD)
    bytes_accessed = (
        xp.size * 4                                    # f32 input
        + (w1.size + w2.size + w3.size) * 2            # bf16 weights
        + (b1.size + b2.size + b3.size) * 4            # f32 biases
        + B_pad * OUT_PAD * 4                          # f32 output
    )

    return pl.pallas_call(
        _mlp_kernel,
        out_shape=jax.ShapeDtypeStruct((B_pad, OUT_PAD), jnp.float32),
        grid_spec=pltpu.PrefetchScalarGridSpec(
            num_scalar_prefetch=0,
            grid=(n_tiles,),
            in_specs=in_specs,
            out_specs=out_spec,
        ),
        compiler_params=pltpu.CompilerParams(
            dimension_semantics=("parallel",)),
        cost_estimate=pl.CostEstimate(
            flops=flops, transcendentals=0, bytes_accessed=bytes_accessed),
    )(xp, w1, b1, w2, b2, w3, b3)


def hand_pose_forward(x, prepared):
    """x: [B, WINDOW_SIZE] float32 -> [B, 21, 2] float32."""
    B = x.shape[0]
    tb, n_tiles, B_pad = _choose_tiles(B)

    # Only pad batch rows (cheap); feature dim stays 200 and dtype stays f32.
    xp = x if B_pad == B else jnp.pad(x, ((0, B_pad - B), (0, 0)))

    try:
        out = _run_pallas(xp, prepared, tb, n_tiles, buffered_weights=True)
    except Exception:
        # pl.Buffered(1) unsupported on this jax/libtpu combo -> default buffering.
        out = _run_pallas(xp, prepared, tb, n_tiles, buffered_weights=False)

    return out[:B, :OUT].reshape(-1, 21, 2)


def reference_forward(x, prepared):
    """Pure-JAX reference with the same bf16 quantization as the kernel."""
    w1, b1, w2, b2, w3, b3 = prepared
    xq = x.astype(jnp.bfloat16).astype(jnp.float32)
    h1 = jnp.maximum(xq @ w1.astype(jnp.float32) + b1, 0.0)
    h1q = h1.astype(jnp.bfloat16).astype(jnp.float32)
    h2 = jnp.maximum(h1q @ w2.astype(jnp.float32) + b2, 0.0)
    h2q = h2.astype(jnp.bfloat16).astype(jnp.float32)
    y = h2q @ w3.astype(jnp.float32) + b3
    return y[:, :OUT].reshape(-1, 21, 2)


if __name__ == "__main__":
    key = jax.random.PRNGKey(0)
    kx, kp = jax.random.split(key)

    params = init_params(kp)
    prepared = prepare_params(params)

    # Exercise both the single-tile path (B=4) and the 2-tile megacore path (B=24).
    for B in (4, 24):
        x = jax.random.normal(jax.random.fold_in(kx, B), (B, WINDOW_SIZE), jnp.float32)
        out = jax.block_until_ready(hand_pose_forward(x, prepared))
        ref = reference_forward(x, prepared)
        assert out.shape == (B, 21, 2), out.shape
        err = float(jnp.max(jnp.abs(out - ref)))
        assert jnp.allclose(out, ref, atol=2e-3, rtol=2e-3), err

    print("KERNEL_OK")
</pallas_src>

<mosaic_0001>
module attributes {stable_mosaic.version = 11 : i64} {
  func.func @_mlp_kernel(%arg0: i32, %arg1: memref<8x200xf32, #tpu.memory_space<vmem>>, %arg2: memref<200x256xbf16, #tpu.memory_space<vmem>>, %arg3: memref<1x256xf32, #tpu.memory_space<vmem>>, %arg4: memref<256x512xbf16, #tpu.memory_space<vmem>>, %arg5: memref<1x512xf32, #tpu.memory_space<vmem>>, %arg6: memref<512x128xbf16, #tpu.memory_space<vmem>>, %arg7: memref<1x128xf32, #tpu.memory_space<vmem>>, %arg8: memref<8x128xf32, #tpu.memory_space<vmem>>) attributes {dimension_semantics = [#tpu.dimension_semantics<parallel>], iteration_bounds = array<i64: 1>, scalar_prefetch = 0 : i64, scratch_operands = 0 : i64, tpu.core_type = #tpu.core_type<tc>, window_params = [{transform_indices = @transform_0, window_bounds = array<i64: 8, 200>}, {pipeline_mode = #tpu.pipeline_mode<synchronous>, transform_indices = @transform_1, window_bounds = array<i64: 200, 256>}, {pipeline_mode = #tpu.pipeline_mode<synchronous>, transform_indices = @transform_2, window_bounds = array<i64: 1, 256>}, {pipeline_mode = #tpu.pipeline_mode<synchronous>, transform_indices = @transform_3, window_bounds = array<i64: 256, 512>}, {pipeline_mode = #tpu.pipeline_mode<synchronous>, transform_indices = @transform_4, window_bounds = array<i64: 1, 512>}, {pipeline_mode = #tpu.pipeline_mode<synchronous>, transform_indices = @transform_5, window_bounds = array<i64: 512, 128>}, {pipeline_mode = #tpu.pipeline_mode<synchronous>, transform_indices = @transform_6, window_bounds = array<i64: 1, 128>}, {transform_indices = @transform_7, window_bounds = array<i64: 8, 128>}]} {
    %c0 = arith.constant 0 : index
    %c0_0 = arith.constant 0 : index
    %0 = vector.load %arg1[%c0, %c0_0] : memref<8x200xf32, #tpu.memory_space<vmem>>, vector<8x200xf32>
    %1 = arith.truncf %0 : vector<8x200xf32> to vector<8x200xbf16>
    %c0_1 = arith.constant 0 : index
    %c0_2 = arith.constant 0 : index
    %2 = vector.load %arg2[%c0_1, %c0_2] : memref<200x256xbf16, #tpu.memory_space<vmem>>, vector<200x256xbf16>
    %cst = arith.constant dense<0.000000e+00> : vector<8x256xf32>
    %3 = tpu.matmul %1, %2, %cst {dimension_numbers = #tpu.dot_dimension_numbers<[1], [0], [0], [1], [0, 0, 1, 1], [], []>} : vector<8x200xbf16>, vector<200x256xbf16>, vector<8x256xf32> -> vector<8x256xf32>
    %c0_3 = arith.constant 0 : index
    %c0_4 = arith.constant 0 : index
    %4 = vector.load %arg3[%c0_3, %c0_4] : memref<1x256xf32, #tpu.memory_space<vmem>>, vector<1x256xf32>
    %5 = vector.broadcast %4 : vector<1x256xf32> to vector<8x256xf32>
    %6 = arith.addf %3, %5 : vector<8x256xf32>
    %cst_5 = arith.constant 0.000000e+00 : f32
    %7 = vector.broadcast %cst_5 : f32 to vector<8x256xf32>
    %8 = arith.maximumf %6, %7 : vector<8x256xf32>
    %9 = arith.truncf %8 : vector<8x256xf32> to vector<8x256xbf16>
    %c0_6 = arith.constant 0 : index
    %c0_7 = arith.constant 0 : index
    %10 = vector.load %arg4[%c0_6, %c0_7] : memref<256x512xbf16, #tpu.memory_space<vmem>>, vector<256x512xbf16>
    %cst_8 = arith.constant dense<0.000000e+00> : vector<8x512xf32>
    %11 = tpu.matmul %9, %10, %cst_8 {dimension_numbers = #tpu.dot_dimension_numbers<[1], [0], [0], [1], [0, 0, 1, 1], [], []>} : vector<8x256xbf16>, vector<256x512xbf16>, vector<8x512xf32> -> vector<8x512xf32>
    %c0_9 = arith.constant 0 : index
    %c0_10 = arith.constant 0 : index
    %12 = vector.load %arg5[%c0_9, %c0_10] : memref<1x512xf32, #tpu.memory_space<vmem>>, vector<1x512xf32>
    %13 = vector.broadcast %12 : vector<1x512xf32> to vector<8x512xf32>
    %14 = arith.addf %11, %13 : vector<8x512xf32>
    %cst_11 = arith.constant 0.000000e+00 : f32
    %15 = vector.broadcast %cst_11 : f32 to vector<8x512xf32>
    %16 = arith.maximumf %14, %15 : vector<8x512xf32>
    %17 = arith.truncf %16 : vector<8x512xf32> to vector<8x512xbf16>
    %c0_12 = arith.constant 0 : index
    %c0_13 = arith.constant 0 : index
    %18 = vector.load %arg6[%c0_12, %c0_13] : memref<512x128xbf16, #tpu.memory_space<vmem>>, vector<512x128xbf16>
    %cst_14 = arith.constant dense<0.000000e+00> : vector<8x128xf32>
    %19 = tpu.matmul %17, %18, %cst_14 {dimension_numbers = #tpu.dot_dimension_numbers<[1], [0], [0], [1], [0, 0, 1, 1], [], []>} : vector<8x512xbf16>, vector<512x128xbf16>, vector<8x128xf32> -> vector<8x128xf32>
    %c0_15 = arith.constant 0 : index
    %c0_16 = arith.constant 0 : index
    %20 = vector.load %arg7[%c0_15, %c0_16] : memref<1x128xf32, #tpu.memory_space<vmem>>, vector<1x128xf32>
    %21 = vector.broadcast %20 : vector<1x128xf32> to vector<8x128xf32>
    %22 = arith.addf %19, %21 : vector<8x128xf32>
    %c0_17 = arith.constant 0 : index
    %c0_18 = arith.constant 0 : index
    %23 = vector.load %arg8[%c0_17, %c0_18] : memref<8x128xf32, #tpu.memory_space<vmem>>, vector<8x128xf32>
    tpu.vector_store %arg8[%c0_17, %c0_18], %22 {strides = array<i32>} : memref<8x128xf32, #tpu.memory_space<vmem>>, vector<8x128xf32>,
    return
  }
  func.func @transform_0(%arg0: i32) -> (i32, i32) {
    %c0_i32 = arith.constant 0 : i32
    %c0_i32_0 = arith.constant 0 : i32
    return %arg0, %c0_i32 : i32, i32
  }
  func.func @transform_1(%arg0: i32) -> (i32, i32) {
    %c0_i32 = arith.constant 0 : i32
    %c0_i32_0 = arith.constant 0 : i32
    %c0_i32_1 = arith.constant 0 : i32
    return %c0_i32, %c0_i32_0 : i32, i32
  }
  func.func @transform_2(%arg0: i32) -> (i32, i32) {
    %c0_i32 = arith.constant 0 : i32
    %c0_i32_0 = arith.constant 0 : i32
    %c0_i32_1 = arith.constant 0 : i32
    return %c0_i32, %c0_i32_0 : i32, i32
  }
  func.func @transform_3(%arg0: i32) -> (i32, i32) {
    %c0_i32 = arith.constant 0 : i32
    %c0_i32_0 = arith.constant 0 : i32
    %c0_i32_1 = arith.constant 0 : i32
    return %c0_i32, %c0_i32_0 : i32, i32
  }
  func.func @transform_4(%arg0: i32) -> (i32, i32) {
    %c0_i32 = arith.constant 0 : i32
    %c0_i32_0 = arith.constant 0 : i32
    %c0_i32_1 = arith.constant 0 : i32
    return %c0_i32, %c0_i32_0 : i32, i32
  }
  func.func @transform_5(%arg0: i32) -> (i32, i32) {
    %c0_i32 = arith.constant 0 : i32
    %c0_i32_0 = arith.constant 0 : i32
    %c0_i32_1 = arith.constant 0 : i32
    return %c0_i32, %c0_i32_0 : i32, i32
  }
  func.func @transform_6(%arg0: i32) -> (i32, i32) {
    %c0_i32 = arith.constant 0 : i32
    %c0_i32_0 = arith.constant 0 : i32
    %c0_i32_1 = arith.constant 0 : i32
    return %c0_i32, %c0_i32_0 : i32, i32
  }
  func.func @transform_7(%arg0: i32) -> (i32, i32) {
    %c0_i32 = arith.constant 0 : i32
    %c0_i32_0 = arith.constant 0 : i32
    return %arg0, %c0_i32 : i32, i32
  }
}

module attributes {stable_mosaic.version = 11 : i64} {
  func.func @_mlp_kernel(%arg0: i32, %arg1: memref<8x200xf32, #tpu.memory_space<vmem>>, %arg2: memref<200x256xbf16, #tpu.memory_space<vmem>>, %arg3: memref<1x256xf32, #tpu.memory_space<vmem>>, %arg4: memref<256x512xbf16, #tpu.memory_space<vmem>>, %arg5: memref<1x512xf32, #tpu.memory_space<vmem>>, %arg6: memref<512x128xbf16, #tpu.memory_space<vmem>>, %arg7: memref<1x128xf32, #tpu.memory_space<vmem>>, %arg8: memref<8x128xf32, #tpu.memory_space<vmem>>) attributes {dimension_semantics = [#tpu.dimension_semantics<parallel>], iteration_bounds = array<i64: 1>, scalar_prefetch = 0 : i64, scratch_operands = 0 : i64, tpu.core_type = #tpu.core_type<tc>, window_params = [{transform_indices = @transform_0, window_bounds = array<i64: 8, 200>}, {pipeline_mode = #tpu.pipeline_mode<synchronous>, transform_indices = @transform_1, window_bounds = array<i64: 200, 256>}, {pipeline_mode = #tpu.pipeline_mode<synchronous>, transform_indices = @transform_2, window_bounds = array<i64: 1, 256>}, {pipeline_mode = #tpu.pipeline_mode<synchronous>, transform_indices = @transform_3, window_bounds = array<i64: 256, 512>}, {pipeline_mode = #tpu.pipeline_mode<synchronous>, transform_indices = @transform_4, window_bounds = array<i64: 1, 512>}, {pipeline_mode = #tpu.pipeline_mode<synchronous>, transform_indices = @transform_5, window_bounds = array<i64: 512, 128>}, {pipeline_mode = #tpu.pipeline_mode<synchronous>, transform_indices = @transform_6, window_bounds = array<i64: 1, 128>}, {transform_indices = @transform_7, window_bounds = array<i64: 8, 128>}]} {
    %c0 = arith.constant 0 : index
    %c0_0 = arith.constant 0 : index
    %0 = vector.load %arg1[%c0, %c0_0] : memref<8x200xf32, #tpu.memory_space<vmem>>, vector<8x200xf32>
    %1 = arith.truncf %0 : vector<8x200xf32> to vector<8x200xbf16>
    %c0_1 = arith.constant 0 : index
    %c0_2 = arith.constant 0 : index
    %2 = vector.load %arg2[%c0_1, %c0_2] : memref<200x256xbf16, #tpu.memory_space<vmem>>, vector<200x256xbf16>
    %cst = arith.constant dense<0.000000e+00> : vector<8x256xf32>
    %3 = tpu.matmul %1, %2, %cst {dimension_numbers = #tpu.dot_dimension_numbers<[1], [0], [0], [1], [0, 0, 1, 1], [], []>} : vector<8x200xbf16>, vector<200x256xbf16>, vector<8x256xf32> -> vector<8x256xf32>
    %c0_3 = arith.constant 0 : index
    %c0_4 = arith.constant 0 : index
    %4 = vector.load %arg3[%c0_3, %c0_4] : memref<1x256xf32, #tpu.memory_space<vmem>>, vector<1x256xf32>
    %5 = vector.broadcast %4 : vector<1x256xf32> to vector<8x256xf32>
    %6 = arith.addf %3, %5 : vector<8x256xf32>
    %cst_5 = arith.constant 0.000000e+00 : f32
    %7 = vector.broadcast %cst_5 : f32 to vector<8x256xf32>
    %8 = arith.maximumf %6, %7 : vector<8x256xf32>
    %9 = arith.truncf %8 : vector<8x256xf32> to vector<8x256xbf16>
    %c0_6 = arith.constant 0 : index
    %c0_7 = arith.constant 0 : index
    %10 = vector.load %arg4[%c0_6, %c0_7] : memref<256x512xbf16, #tpu.memory_space<vmem>>, vector<256x512xbf16>
    %cst_8 = arith.constant dense<0.000000e+00> : vector<8x512xf32>
    %11 = tpu.matmul %9, %10, %cst_8 {dimension_numbers = #tpu.dot_dimension_numbers<[1], [0], [0], [1], [0, 0, 1, 1], [], []>} : vector<8x256xbf16>, vector<256x512xbf16>, vector<8x512xf32> -> vector<8x512xf32>
    %c0_9 = arith.constant 0 : index
    %c0_10 = arith.constant 0 : index
    %12 = vector.load %arg5[%c0_9, %c0_10] : memref<1x512xf32, #tpu.memory_space<vmem>>, vector<1x512xf32>
    %13 = vector.broadcast %12 : vector<1x512xf32> to vector<8x512xf32>
    %14 = arith.addf %11, %13 : vector<8x512xf32>
    %cst_11 = arith.constant 0.000000e+00 : f32
    %15 = vector.broadcast %cst_11 : f32 to vector<8x512xf32>
    %16 = arith.maximumf %14, %15 : vector<8x512xf32>
    %17 = arith.truncf %16 : vector<8x512xf32> to vector<8x512xbf16>
    %c0_12 = arith.constant 0 : index
    %c0_13 = arith.constant 0 : index
    %18 = vector.load %arg6[%c0_12, %c0_13] : memref<512x128xbf16, #tpu.memory_space<vmem>>, vector<512x128xbf16>
    %cst_14 = arith.constant dense<0.000000e+00> : vector<8x128xf32>
    %19 = tpu.matmul %17, %18, %cst_14 {dimension_numbers = #tpu.dot_dimension_numbers<[1], [0], [0], [1], [0, 0, 1, 1], [], []>} : vector<8x512xbf16>, vector<512x128xbf16>, vector<8x128xf32> -> vector<8x128xf32>
    %c0_15 = arith.constant 0 : index
    %c0_16 = arith.constant 0 : index
    %20 = vector.load %arg7[%c0_15, %c0_16] : memref<1x128xf32, #tpu.memory_space<vmem>>, vector<1x128xf32>
    %21 = vector.broadcast %20 : vector<1x128xf32> to vector<8x128xf32>
    %22 = arith.addf %19, %21 : vector<8x128xf32>
    %c0_17 = arith.constant 0 : index
    %c0_18 = arith.constant 0 : index
    %23 = vector.load %arg8[%c0_17, %c0_18] : memref<8x128xf32, #tpu.memory_space<vmem>>, vector<8x128xf32>
    tpu.vector_store %arg8[%c0_17, %c0_18], %22 {strides = array<i32>} : memref<8x128xf32, #tpu.memory_space<vmem>>, vector<8x128xf32>,
    return
  }
  func.func @transform_0(%arg0: i32) -> (i32, i32) {
    %c0_i32 = arith.constant 0 : i32
    %c0_i32_0 = arith.constant 0 : i32
    return %arg0, %c0_i32 : i32, i32
  }
  func.func @transform_1(%arg0: i32) -> (i32, i32) {
    %c0_i32 = arith.constant 0 : i32
    %c0_i32_0 = arith.constant 0 : i32
    %c0_i32_1 = arith.constant 0 : i32
    return %c0_i32, %c0_i32_0 : i32, i32
  }
  func.func @transform_2(%arg0: i32) -> (i32, i32) {
    %c0_i32 = arith.constant 0 : i32
    %c0_i32_0 = arith.constant 0 : i32
    %c0_i32_1 = arith.constant 0 : i32
    return %c0_i32, %c0_i32_0 : i32, i32
  }
  func.func @transform_3(%arg0: i32) -> (i32, i32) {
    %c0_i32 = arith.constant 0 : i32
    %c0_i32_0 = arith.constant 0 : i32
    %c0_i32_1 = arith.constant 0 : i32
    return %c0_i32, %c0_i32_0 : i32, i32
  }
  func.func @transform_4(%arg0: i32) -> (i32, i32) {
    %c0_i32 = arith.constant 0 : i32
    %c0_i32_0 = arith.constant 0 : i32
    %c0_i32_1 = arith.constant 0 : i32
    return %c0_i32, %c0_i32_0 : i32, i32
  }
  func.func @transform_5(%arg0: i32) -> (i32, i32) {
    %c0_i32 = arith.constant 0 : i32
    %c0_i32_0 = arith.constant 0 : i32
    %c0_i32_1 = arith.constant 0 : i32
    return %c0_i32, %c0_i32_0 : i32, i32
  }
  func.func @transform_6(%arg0: i32) -> (i32, i32) {
    %c0_i32 = arith.constant 0 : i32
    %c0_i32_0 = arith.constant 0 : i32
    %c0_i32_1 = arith.constant 0 : i32
    return %c0_i32, %c0_i32_0 : i32, i32
  }
  func.func @transform_7(%arg0: i32) -> (i32, i32) {
    %c0_i32 = arith.constant 0 : i32
    %c0_i32_0 = arith.constant 0 : i32
    return %arg0, %c0_i32 : i32, i32
  }
}

</mosaic_0001>

<llo_original>
// kernel: tpu_custom_call.1
$region0: #{tpu_custom_call.1}
  #allocation0 [shape = 'u32[]', space=smem, size = 0x4, offset = 0x4, fixed_abs, tag = 'smem constant byte address 0x4 - core index']
  #allocation1 [shape = 'u32[144,128]{1,0:T(1,128)}', space=vmem, size = 0x12000, scoped, tag = 'internal scratch']
  %s0 = inlined_call_operand.hbm [shape: f32[8,200], index: 0, kind: input, shape index: {}]
  %s1 = inlined_call_operand.hbm [shape: bf16[200,256], index: 1, kind: input, shape index: {}]
  %s2 = inlined_call_operand.vmem [shape: f32[1,256], index: 2, kind: input, shape index: {}]
  %s3 = inlined_call_operand.hbm [shape: bf16[256,512], index: 3, kind: input, shape index: {}]
  %s4 = inlined_call_operand.vmem [shape: f32[1,512], index: 4, kind: input, shape index: {}]
  %s5 = inlined_call_operand.hbm [shape: bf16[512,128], index: 5, kind: input, shape index: {}]
  %s6 = inlined_call_operand.vmem [shape: f32[1,128], index: 6, kind: input, shape index: {}]
  %s7 = inlined_call_operand.hbm [shape: f32[8,128], index: 7, kind: output, shape index: {}]
  %s8 = sld [smem:[#allocation0]]
  $region54: #{tpu_custom_call.1} parent=0
    _
  %s10 = ssub.s32 1, %s8
  %s11 = scalar_select 0, %s10, %s8
  $region1: #{tpu_custom_call.1} parent=0
    #allocation2 [shape = 'u8[8192]{0}', space=vmem, size = 0x2000, scoped, tag = 'input window, operand 0, single buffered']
    #allocation3 [shape = 's32[1]{0}', space=sflag, size = 0x4, scoped, tag = 'scoped memory for tpu_custom_call.1']
    #allocation4 [shape = 's32[1]{0}', space=sflag, size = 0x4, scoped, tag = 'scoped memory for tpu_custom_call.1']
    #allocation5 [shape = 'u8[102400]{0}', space=vmem, size = 0x19000, scoped, tag = 'input window, operand 1, single buffered']
    #allocation6 [shape = 's32[1]{0}', space=sflag, size = 0x4, scoped, tag = 'scoped memory for tpu_custom_call.1']
    #allocation7 [shape = 'u8[262144]{0}', space=vmem, size = 0x40000, scoped, tag = 'input window, operand 3, single buffered']
    #allocation8 [shape = 'u8[131072]{0}', space=vmem, size = 0x20000, scoped, tag = 'input window, operand 5, single buffered']
    #allocation9 [shape = 's32[1]{0}', space=sflag, size = 0x4, scoped, tag = 'scoped memory for tpu_custom_call.1']
    #allocation10 [shape = 'u8[4096]{0}', space=vmem, size = 0x1000, scoped, tag = 'output window, operand 0, single buffered']
    %12 = vsyncpa [#allocation3], 0
    %13 = vsyncpa [#allocation6], 0
    %14 = vsyncpa [#allocation9], 0
    %15 = vsyncpa [#allocation4], 0
    // Predicated region
    $region2: #{tpu_custom_call.1} parent=1 // pred_check
      _
    $region3: #{tpu_custom_call.1} parent=1 // pred_check_branch
      %17 = sbr.rel (0) target = $region5
    $region4: #{tpu_custom_call.1} parent=1 // pred_region
      %s19 = ssub.s32 256, 256
      %20 = vsyncadd [#allocation3], %s19
      %s22 = sshll.u32 [#allocation2], 4
      %s23 = int_to_ptr.vmem [resolvable:$true] %s22
      %25 = dma.hbm_to_vmem [thread:$0]  %s0, 256, %s23, [#allocation3]
    $region5: #{tpu_custom_call.1} parent=1 // pred_fallthru
      _
    // Predicated region
    $region6: #{tpu_custom_call.1} parent=1 // pred_check
      _
    $region7: #{tpu_custom_call.1} parent=1 // pred_check_branch
      %27 = sbr.rel (0) target = $region9
    $region8: #{tpu_custom_call.1} parent=1 // pred_region
      %s29 = ssub.s32 3200, 3200
      %30 = vsyncadd [#allocation6], %s29
      %s31 = sshll.u32 [#allocation5], 4
      %s32 = int_to_ptr.vmem [resolvable:$true] %s31
      %37 = dma.hbm_to_vmem [thread:$0]  %s1, 3200, %s32, [#allocation6], 128, 128, 8
    $region9: #{tpu_custom_call.1} parent=1 // pred_fallthru
      _
    // Predicated region
    $region10: #{tpu_custom_call.1} parent=1 // pred_check
      _
    $region11: #{tpu_custom_call.1} parent=1 // pred_check_branch
      %39 = sbr.rel (0) target = $region13
    $region12: #{tpu_custom_call.1} parent=1 // pred_region
      _
    $region13: #{tpu_custom_call.1} parent=1 // pred_fallthru
      _
    // Predicated region
    $region14: #{tpu_custom_call.1} parent=1 // pred_check
      _
    $region15: #{tpu_custom_call.1} parent=1 // pred_check_branch
      %41 = sbr.rel (0) target = $region17
    $region16: #{tpu_custom_call.1} parent=1 // pred_region
      %s43 = ssub.s32 8192, 8192
      %44 = vsyncadd [#allocation6], %s43
      %s45 = sshll.u32 [#allocation7], 4
      %s46 = int_to_ptr.vmem [resolvable:$true] %s45
      %51 = dma.hbm_to_vmem [thread:$0]  %s3, 8192, %s46, [#allocation6], 256, 256, 16
    $region17: #{tpu_custom_call.1} parent=1 // pred_fallthru
      _
    // Predicated region
    $region18: #{tpu_custom_call.1} parent=1 // pred_check
      _
    $region19: #{tpu_custom_call.1} parent=1 // pred_check_branch
      %53 = sbr.rel (0) target = $region21
    $region20: #{tpu_custom_call.1} parent=1 // pred_region
      _
    $region21: #{tpu_custom_call.1} parent=1 // pred_fallthru
      _
    // Predicated region
    $region22: #{tpu_custom_call.1} parent=1 // pred_check
      _
    $region23: #{tpu_custom_call.1} parent=1 // pred_check_branch
      %55 = sbr.rel (0) target = $region25
    $region24: #{tpu_custom_call.1} parent=1 // pred_region
      %s57 = ssub.s32 4096, 4096
      %58 = vsyncadd [#allocation9], %s57
      %s59 = sshll.u32 [#allocation8], 4
      %s60 = int_to_ptr.vmem [resolvable:$true] %s59
      %65 = dma.hbm_to_vmem [thread:$0]  %s5, 4096, %s60, [#allocation9], 64, 64, 4
    $region25: #{tpu_custom_call.1} parent=1 // pred_fallthru
      _
    // Predicated region
    $region26: #{tpu_custom_call.1} parent=1 // pred_check
      _
    $region27: #{tpu_custom_call.1} parent=1 // pred_check_branch
      %67 = sbr.rel (0) target = $region29
    $region28: #{tpu_custom_call.1} parent=1 // pred_region
      _
    $region29: #{tpu_custom_call.1} parent=1 // pred_fallthru
      _
    // Predicated region
    $region30: #{tpu_custom_call.1} parent=1 // pred_check
      _
    $region31: #{tpu_custom_call.1} parent=1 // pred_check_branch
      %69 = sbr.rel (0) target = $region33
    $region32: #{tpu_custom_call.1} parent=1 // pred_region
      %70 = dma.done [#allocation3], 256
    $region33: #{tpu_custom_call.1} parent=1 // pred_fallthru
      _
    // Predicated region
    $region34: #{tpu_custom_call.1} parent=1 // pred_check
      _
    $region35: #{tpu_custom_call.1} parent=1 // pred_check_branch
      %72 = sbr.rel (0) target = $region37
    $region36: #{tpu_custom_call.1} parent=1 // pred_region
      %73 = dma.done [#allocation6], 3200
    $region37: #{tpu_custom_call.1} parent=1 // pred_fallthru
      _
    // Predicated region
    $region38: #{tpu_custom_call.1} parent=1 // pred_check
      _
    $region39: #{tpu_custom_call.1} parent=1 // pred_check_branch
      %75 = sbr.rel (0) target = $region41
    $region40: #{tpu_custom_call.1} parent=1 // pred_region
      %76 = dma.done [#allocation6], 8192
    $region41: #{tpu_custom_call.1} parent=1 // pred_fallthru
      _
    // Predicated region
    $region42: #{tpu_custom_call.1} parent=1 // pred_check
      _
    $region43: #{tpu_custom_call.1} parent=1 // pred_check_branch
      %78 = sbr.rel (0) target = $region45
    $region44: #{tpu_custom_call.1} parent=1 // pred_region
      %79 = dma.done [#allocation9], 4096
    $region45: #{tpu_custom_call.1} parent=1 // pred_fallthru
      _
    %v81 = vld [vmem:[#allocation2] sm:$0xff]
    %v82 = vld [vmem:[#allocation2 + $0x8] sm:$0xff]
    %v83 = vpack.c.bf16 %v81, %v81
    %v84 = vpack.c.bf16 %v82, %v82
    %v85 = vld [vmem:[#allocation5] sm:$0xff]
    %v86 = vld [vmem:[#allocation5 + $0x8] sm:$0xff]
    %v87 = vld [vmem:[#allocation5 + $0x10] sm:$0xff]
    %v88 = vld [vmem:[#allocation5 + $0x18] sm:$0xff]
    %v89 = vld [vmem:[#allocation5 + $0x20] sm:$0xff]
    %v90 = vld [vmem:[#allocation5 + $0x28] sm:$0xff]
    %v91 = vld [vmem:[#allocation5 + $0x30] sm:$0xff]
    %v92 = vld [vmem:[#allocation5 + $0x38] sm:$0xff]
    %v93 = vld [vmem:[#allocation5 + $0x40] sm:$0xff]
    %v94 = vld [vmem:[#allocation5 + $0x48] sm:$0xff]
    %v95 = vld [vmem:[#allocation5 + $0x50] sm:$0xff]
    %v96 = vld [vmem:[#allocation5 + $0x58] sm:$0xff]
    %v97 = vld [vmem:[#allocation5 + $0x60] sm:$0xff]
    %v98 = vld [vmem:[#allocation5 + $0x68] sm:$0xff]
    %v99 = vld [vmem:[#allocation5 + $0x70] sm:$0xff]
    %v100 = vld [vmem:[#allocation5 + $0x78] sm:$0xff]
    %v101 = vld [vmem:[#allocation5 + $0x80] sm:$0xff]
    %v102 = vld [vmem:[#allocation5 + $0x88] sm:$0xff]
    %v103 = vld [vmem:[#allocation5 + $0x90] sm:$0xff]
    %v104 = vld [vmem:[#allocation5 + $0x98] sm:$0xff]
    %v105 = vld [vmem:[#allocation5 + $0xa0] sm:$0xff]
    %v106 = vld [vmem:[#allocation5 + $0xa8] sm:$0xff]
    %v107 = vld [vmem:[#allocation5 + $0xb0] sm:$0xff]
    %v108 = vld [vmem:[#allocation5 + $0xb8] sm:$0xff]
    %v109 = vld [vmem:[#allocation5 + $0xc0] sm:$0xff]
    %v110 = vld [vmem:[%s2] sm:$0x3]
    %v112 = vlaneseq
    %v113 = vshrl.u32 %v112, 7
    %v114 = vsub.s32 0, %v113
    %v115 = vrot.slane %v110, %v114
    %v116 = vlaneseq
    %v117 = vshrl.u32 %v116, 7
    %v118 = vsub.s32 1, %v117
    %v119 = vrot.slane %v110, %v118
    %v147 = vunpack.c.l.b16 %v85
    %v148 = vunpack.c.h.b16 %v85
    %v149 = vunpack.c.l.b16 %v86
    %v150 = vunpack.c.h.b16 %v86
    %v151 = vunpack.c.l.b16 %v87
    %v152 = vunpack.c.h.b16 %v87
    %v153 = vunpack.c.l.b16 %v88
    %v154 = vunpack.c.h.b16 %v88
    %v155 = vunpack.c.l.b16 %v89
    %v156 = vunpack.c.h.b16 %v89
    %v157 = vunpack.c.l.b16 %v90
    %v158 = vunpack.c.h.b16 %v90
    %v159 = vunpack.c.l.b16 %v91
    %v160 = vunpack.c.h.b16 %v91
    %v161 = vunpack.c.l.b16 %v92
    %v162 = vunpack.c.h.b16 %v92
    %v163 = vunpack.c.l.b16 %v93
    %v164 = vunpack.c.h.b16 %v93
    %v165 = vunpack.c.l.b16 %v94
    %v166 = vunpack.c.h.b16 %v94
    %v167 = vunpack.c.l.b16 %v95
    %v168 = vunpack.c.h.b16 %v95
    %v169 = vunpack.c.l.b16 %v96
    %v170 = vunpack.c.h.b16 %v96
    %v171 = vunpack.c.l.b16 %v97
    %v172 = vunpack.c.h.b16 %v97
    %v173 = vunpack.c.l.b16 %v98
    %v174 = vunpack.c.h.b16 %v98
    %v175 = vunpack.c.l.b16 %v99
    %v176 = vunpack.c.h.b16 %v99
    %v177 = vunpack.c.l.b16 %v100
    %v178 = vunpack.c.h.b16 %v100
    %v179 = vunpack.c.l.b16 %v101
    %v180 = vunpack.c.h.b16 %v101
    %v181 = vunpack.c.l.b16 %v102
    %v182 = vunpack.c.h.b16 %v102
    %v183 = vunpack.c.l.b16 %v103
    %v184 = vunpack.c.h.b16 %v103
    %v185 = vunpack.c.l.b16 %v104
    %v186 = vunpack.c.h.b16 %v104
    %v187 = vunpack.c.l.b16 %v105
    %v188 = vunpack.c.h.b16 %v105
    %v189 = vunpack.c.l.b16 %v106
    %v190 = vunpack.c.h.b16 %v106
    %v191 = vunpack.c.l.b16 %v107
    %v192 = vunpack.c.h.b16 %v107
    %v193 = vunpack.c.l.b16 %v108
    %v194 = vunpack.c.h.b16 %v108
    %v195 = vunpack.c.l.b16 %v109
    %v196 = vunpack.c.h.b16 %v109
    %v197 = vpack.c.b16 %v149, %v147
    %v198 = vpack.c.b16 %v150, %v148
    %v199 = vpack.c.b16 %v153, %v151
    %v200 = vpack.c.b16 %v154, %v152
    %v201 = vpack.c.b16 %v157, %v155
    %v202 = vpack.c.b16 %v158, %v156
    %v203 = vpack.c.b16 %v161, %v159
    %v204 = vpack.c.b16 %v162, %v160
    %v205 = vpack.c.b16 %v165, %v163
    %v206 = vpack.c.b16 %v166, %v164
    %v207 = vpack.c.b16 %v169, %v167
    %v208 = vpack.c.b16 %v170, %v168
    %v209 = vpack.c.b16 %v173, %v171
    %v210 = vpack.c.b16 %v174, %v172
    %v211 = vpack.c.b16 %v177, %v175
    %v212 = vpack.c.b16 %v178, %v176
    %v213 = vpack.c.b16 %v181, %v179
    %v214 = vpack.c.b16 %v182, %v180
    %v215 = vpack.c.b16 %v185, %v183
    %v216 = vpack.c.b16 %v186, %v184
    %v217 = vpack.c.b16 %v189, %v187
    %v218 = vpack.c.b16 %v190, %v188
    %v219 = vpack.c.b16 %v193, %v191
    %v220 = vpack.c.b16 %v194, %v192
    %v221 = vpack.c.b16 %v195, %v195
    %v222 = vpack.c.b16 %v196, %v196
    %vm247 = vcmask 588800
    %v249 = vsel %vm247, %v84, 0
    %vm251 = vcmask 1043456
    %v253 = vsel %vm251, %v221, 0
    %v256 = vsel %vm251, %v222, 0
    %258 = vmatprep.subr.bf16.mxu0 %v198
    %259 = vmatpush1.bf16.msra.mxu0 %v197
    %260 = vmatprep.subr.bf16.mxu0 %v200
    %261 = vmatpush1.bf16.msra.mxu0 %v199
    %262 = vmatprep.subr.bf16.mxu0 %v202
    %263 = vmatpush1.bf16.msra.mxu0 %v201
    %264 = vmatprep.subr.bf16.mxu0 %v204
    %265 = vmatpush1.bf16.msra.mxu0 %v203
    %266 = vmatprep.subr.bf16.mxu0 %v206
    %267 = vmatpush1.bf16.msra.mxu0 %v205
    %268 = vmatprep.subr.bf16.mxu0 %v208
    %269 = vmatpush1.bf16.msra.mxu0 %v207
    %270 = vmatprep.subr.bf16.mxu0 %v210
    %271 = vmatpush1.bf16.msra.mxu0 %v209
    %272 = vmatprep.subr.bf16.mxu0 %v212
    %273 = vmatpush1.bf16.msra.mxu0 %v211
    %274 = vmatprep.subr.bf16.mxu0 %v214
    %275 = vmatpush1.bf16.msra.mxu0 %v213
    %276 = vmatprep.subr.bf16.mxu0 %v216
    %277 = vmatpush1.bf16.msra.mxu0 %v215
    %278 = vmatprep.subr.bf16.mxu0 %v218
    %279 = vmatpush1.bf16.msra.mxu0 %v217
    %280 = vmatprep.subr.bf16.mxu0 %v220
    %281 = vmatpush1.bf16.msra.mxu0 %v219
    %282 = vmatprep.subr.bf16.mxu0 %v256
    %283 = vmatpush1.bf16.msra.mxu0 %v253
    %284 = vmatprep.subr.bf16.mxu0 0
    %285 = vmatpush1.bf16.msra.mxu0 0
    %286 = vmatprep.subr.bf16.mxu0 0
    %287 = vmatpush1.bf16.msra.mxu0 0
    %288 = vmatprep.subr.bf16.mxu0 0
    %289 = vmatpush1.bf16.msra.mxu0 0
    %290 = vmatprep.mubr.bf16.mxu0 %v249
    %291 = vmatmul.mubr.bf16.gmra.mrb[0].mxu0 %v83
    %v292 = vpop.f32.mrb[0].mxu0
    %v293 = vadd.f32 %v115, %v292
    %v294 = vpop.f32.mrb[0].mxu0
    %v295 = vadd.f32 %v119, %v294
    %v296 = vpop.f32.mrb[0].mxu0
    %v297 = vpop.f32.mrb[0].mxu0
    %298 = vdwg.mxu0
    %v299 = vmax.f32 %v293, 0.0
    %v300 = vmax.f32 %v295, 0.0
    %v301 = vpack.c.bf16 %v299, %v299
    %v302 = vpack.c.bf16 %v300, %v300
    %v303 = vld [vmem:[#allocation7] sm:$0xff]
    %v304 = vld [vmem:[#allocation7 + $0x8] sm:$0xff]
    %v305 = vld [vmem:[#allocation7 + $0x10] sm:$0xff]
    %v306 = vld [vmem:[#allocation7 + $0x18] sm:$0xff]
    %v307 = vld [vmem:[#allocation7 + $0x20] sm:$0xff]
    %v308 = vld [vmem:[#allocation7 + $0x28] sm:$0xff]
    %v309 = vld [vmem:[#allocation7 + $0x30] sm:$0xff]
    %v310 = vld [vmem:[#allocation7 + $0x38] sm:$0xff]
    %v311 = vld [vmem:[#allocation7 + $0x40] sm:$0xff]
    %v312 = vld [vmem:[#allocation7 + $0x48] sm:$0xff]
    %v313 = vld [vmem:[#allocation7 + $0x50] sm:$0xff]
    %v314 = vld [vmem:[#allocation7 + $0x58] sm:$0xff]
    %v315 = vld [vmem:[#allocation7 + $0x60] sm:$0xff]
    %v316 = vld [vmem:[#allocation7 + $0x68] sm:$0xff]
    %v317 = vld [vmem:[#allocation7 + $0x70] sm:$0xff]
    %v318 = vld [vmem:[#allocation7 + $0x78] sm:$0xff]
    %v319 = vld [vmem:[#allocation7 + $0x80] sm:$0xff]
    %v320 = vld [vmem:[#allocation7 + $0x88] sm:$0xff]
    %v321 = vld [vmem:[#allocation7 + $0x90] sm:$0xff]
    %v322 = vld [vmem:[#allocation7 + $0x98] sm:$0xff]
    %v323 = vld [vmem:[#allocation7 + $0xa0] sm:$0xff]
    %v324 = vld [vmem:[#allocation7 + $0xa8] sm:$0xff]
    %v325 = vld [vmem:[#allocation7 + $0xb0] sm:$0xff]
    %v326 = vld [vmem:[#allocation7 + $0xb8] sm:$0xff]
    %v327 = vld [vmem:[#allocation7 + $0xc0] sm:$0xff]
    %v328 = vld [vmem:[#allocation7 + $0xc8] sm:$0xff]
    %v329 = vld [vmem:[#allocation7 + $0xd0] sm:$0xff]
    %v330 = vld [vmem:[#allocation7 + $0xd8] sm:$0xff]
    %v331 = vld [vmem:[#allocation7 + $0xe0] sm:$0xff]
    %v332 = vld [vmem:[#allocation7 + $0xe8] sm:$0xff]
    %v333 = vld [vmem:[#allocation7 + $0xf0] sm:$0xff]
    %v334 = vld [vmem:[#allocation7 + $0xf8] sm:$0xff]
    %v335 = vld [vmem:[#allocation7 + $0x100] sm:$0xff]
    %v336 = vld [vmem:[#allocation7 + $0x108] sm:$0xff]
    %v337 = vld [vmem:[#allocation7 + $0x110] sm:$0xff]
    %v338 = vld [vmem:[#allocation7 + $0x118] sm:$0xff]
    %v339 = vld [vmem:[#allocation7 + $0x120] sm:$0xff]
    %v340 = vld [vmem:[#allocation7 + $0x128] sm:$0xff]
    %v341 = vld [vmem:[#allocation7 + $0x130] sm:$0xff]
    %v342 = vld [vmem:[#allocation7 + $0x138] sm:$0xff]
    %v343 = vld [vmem:[#allocation7 + $0x140] sm:$0xff]
    %v344 = vld [vmem:[#allocation7 + $0x148] sm:$0xff]
    %v345 = vld [vmem:[#allocation7 + $0x150] sm:$0xff]
    %v346 = vld [vmem:[#allocation7 + $0x158] sm:$0xff]
    %v347 = vld [vmem:[#allocation7 + $0x160] sm:$0xff]
    %v348 = vld [vmem:[#allocation7 + $0x168] sm:$0xff]
    %v349 = vld [vmem:[#allocation7 + $0x170] sm:$0xff]
    %v350 = vld [vmem:[#allocation7 + $0x178] sm:$0xff]
    %v351 = vld [vmem:[#allocation7 + $0x180] sm:$0xff]
    %v352 = vld [vmem:[#allocation7 + $0x188] sm:$0xff]
    %v353 = vld [vmem:[#allocation7 + $0x190] sm:$0xff]
    %v354 = vld [vmem:[#allocation7 + $0x198] sm:$0xff]
    %v355 = vld [vmem:[#allocation7 + $0x1a0] sm:$0xff]
    %v356 = vld [vmem:[#allocation7 + $0x1a8] sm:$0xff]
    %v357 = vld [vmem:[#allocation7 + $0x1b0] sm:$0xff]
    %v358 = vld [vmem:[#allocation7 + $0x1b8] sm:$0xff]
    %v359 = vld [vmem:[#allocation7 + $0x1c0] sm:$0xff]
    %v360 = vld [vmem:[#allocation7 + $0x1c8] sm:$0xff]
    %v361 = vld [vmem:[#allocation7 + $0x1d0] sm:$0xff]
    %v362 = vld [vmem:[#allocation7 + $0x1d8] sm:$0xff]
    %v363 = vld [vmem:[#allocation7 + $0x1e0] sm:$0xff]
    %v364 = vld [vmem:[#allocation7 + $0x1e8] sm:$0xff]
    %v365 = vld [vmem:[#allocation7 + $0x1f0] sm:$0xff]
    %v366 = vld [vmem:[#allocation7 + $0x1f8] sm:$0xff]
    %v367 = vld [vmem:[%s4] sm:$0xf]
    %v369 = vlaneseq
    %v370 = vshrl.u32 %v369, 7
    %v371 = vsub.s32 0, %v370
    %v372 = vrot.slane %v367, %v371
    %v373 = vlaneseq
    %v374 = vshrl.u32 %v373, 7
    %v375 = vsub.s32 1, %v374
    %v376 = vrot.slane %v367, %v375
    %v377 = vlaneseq
    %v378 = vshrl.u32 %v377, 7
    %v379 = vsub.s32 2, %v378
    %v380 = vrot.slane %v367, %v379
    %v381 = vlaneseq
    %v382 = vshrl.u32 %v381, 7
    %v383 = vsub.s32 3, %v382
    %v384 = vrot.slane %v367, %v383
    %v453 = vunpack.c.l.b16 %v303
    %v454 = vunpack.c.h.b16 %v303
    %v455 = vunpack.c.l.b16 %v304
    %v456 = vunpack.c.h.b16 %v304
    %v457 = vunpack.c.l.b16 %v305
    %v458 = vunpack.c.h.b16 %v305
    %v459 = vunpack.c.l.b16 %v306
    %v460 = vunpack.c.h.b16 %v306
    %v461 = vunpack.c.l.b16 %v307
    %v462 = vunpack.c.h.b16 %v307
    %v463 = vunpack.c.l.b16 %v308
    %v464 = vunpack.c.h.b16 %v308
    %v465 = vunpack.c.l.b16 %v309
    %v466 = vunpack.c.h.b16 %v309
    %v467 = vunpack.c.l.b16 %v310
    %v468 = vunpack.c.h.b16 %v310
    %v469 = vunpack.c.l.b16 %v311
    %v470 = vunpack.c.h.b16 %v311
    %v471 = vunpack.c.l.b16 %v312
    %v472 = vunpack.c.h.b16 %v312
    %v473 = vunpack.c.l.b16 %v313
    %v474 = vunpack.c.h.b16 %v313
    %v475 = vunpack.c.l.b16 %v314
    %v476 = vunpack.c.h.b16 %v314
    %v477 = vunpack.c.l.b16 %v315
    %v478 = vunpack.c.h.b16 %v315
    %v479 = vunpack.c.l.b16 %v316
    %v480 = vunpack.c.h.b16 %v316
    %v481 = vunpack.c.l.b16 %v317
    %v482 = vunpack.c.h.b16 %v317
    %v483 = vunpack.c.l.b16 %v318
    %v484 = vunpack.c.h.b16 %v318
    %v485 = vunpack.c.l.b16 %v319
    %v486 = vunpack.c.h.b16 %v319
    %v487 = vunpack.c.l.b16 %v320
    %v488 = vunpack.c.h.b16 %v320
    %v489 = vunpack.c.l.b16 %v321
    %v490 = vunpack.c.h.b16 %v321
    %v491 = vunpack.c.l.b16 %v322
    %v492 = vunpack.c.h.b16 %v322
    %v493 = vunpack.c.l.b16 %v323
    %v494 = vunpack.c.h.b16 %v323
    %v495 = vunpack.c.l.b16 %v324
    %v496 = vunpack.c.h.b16 %v324
    %v497 = vunpack.c.l.b16 %v325
    %v498 = vunpack.c.h.b16 %v325
    %v499 = vunpack.c.l.b16 %v326
    %v500 = vunpack.c.h.b16 %v326
    %v501 = vunpack.c.l.b16 %v327
    %v502 = vunpack.c.h.b16 %v327
    %v503 = vunpack.c.l.b16 %v328
    %v504 = vunpack.c.h.b16 %v328
    %v505 = vunpack.c.l.b16 %v329
    %v506 = vunpack.c.h.b16 %v329
    %v507 = vunpack.c.l.b16 %v330
    %v508 = vunpack.c.h.b16 %v330
    %v509 = vunpack.c.l.b16 %v331
    %v510 = vunpack.c.h.b16 %v331
    %v511 = vunpack.c.l.b16 %v332
    %v512 = vunpack.c.h.b16 %v332
    %v513 = vunpack.c.l.b16 %v333
    %v514 = vunpack.c.h.b16 %v333
    %v515 = vunpack.c.l.b16 %v334
    %v516 = vunpack.c.h.b16 %v334
    %v517 = vunpack.c.l.b16 %v335
    %v518 = vunpack.c.h.b16 %v335
    %v519 = vunpack.c.l.b16 %v336
    %v520 = vunpack.c.h.b16 %v336
    %v521 = vunpack.c.l.b16 %v337
    %v522 = vunpack.c.h.b16 %v337
    %v523 = vunpack.c.l.b16 %v338
    %v524 = vunpack.c.h.b16 %v338
    %v525 = vunpack.c.l.b16 %v339
    %v526 = vunpack.c.h.b16 %v339
    %v527 = vunpack.c.l.b16 %v340
    %v528 = vunpack.c.h.b16 %v340
    %v529 = vunpack.c.l.b16 %v341
    %v530 = vunpack.c.h.b16 %v341
    %v531 = vunpack.c.l.b16 %v342
    %v532 = vunpack.c.h.b16 %v342
    %v533 = vunpack.c.l.b16 %v343
    %v534 = vunpack.c.h.b16 %v343
    %v535 = vunpack.c.l.b16 %v344
    %v536 = vunpack.c.h.b16 %v344
    %v537 = vunpack.c.l.b16 %v345
    %v538 = vunpack.c.h.b16 %v345
    %v539 = vunpack.c.l.b16 %v346
    %v540 = vunpack.c.h.b16 %v346
    %v541 = vunpack.c.l.b16 %v347
    %v542 = vunpack.c.h.b16 %v347
    %v543 = vunpack.c.l.b16 %v348
    %v544 = vunpack.c.h.b16 %v348
    %v545 = vunpack.c.l.b16 %v349
    %v546 = vunpack.c.h.b16 %v349
    %v547 = vunpack.c.l.b16 %v350
    %v548 = vunpack.c.h.b16 %v350
    %v549 = vunpack.c.l.b16 %v351
    %v550 = vunpack.c.h.b16 %v351
    %v551 = vunpack.c.l.b16 %v352
    %v552 = vunpack.c.h.b16 %v352
    %v553 = vunpack.c.l.b16 %v353
    %v554 = vunpack.c.h.b16 %v353
    %v555 = vunpack.c.l.b16 %v354
    %v556 = vunpack.c.h.b16 %v354
    %v557 = vunpack.c.l.b16 %v355
    %v558 = vunpack.c.h.b16 %v355
    %v559 = vunpack.c.l.b16 %v356
    %v560 = vunpack.c.h.b16 %v356
    %v561 = vunpack.c.l.b16 %v357
    %v562 = vunpack.c.h.b16 %v357
    %v563 = vunpack.c.l.b16 %v358
    %v564 = vunpack.c.h.b16 %v358
    %v565 = vunpack.c.l.b16 %v359
    %v566 = vunpack.c.h.b16 %v359
    %v567 = vunpack.c.l.b16 %v360
    %v568 = vunpack.c.h.b16 %v360
    %v569 = vunpack.c.l.b16 %v361
    %v570 = vunpack.c.h.b16 %v361
    %v571 = vunpack.c.l.b16 %v362
    %v572 = vunpack.c.h.b16 %v362
    %v573 = vunpack.c.l.b16 %v363
    %v574 = vunpack.c.h.b16 %v363
    %v575 = vunpack.c.l.b16 %v364
    %v576 = vunpack.c.h.b16 %v364
    %v577 = vunpack.c.l.b16 %v365
    %v578 = vunpack.c.h.b16 %v365
    %v579 = vunpack.c.l.b16 %v366
    %v580 = vunpack.c.h.b16 %v366
    %v581 = vpack.c.b16 %v457, %v453
    %v582 = vpack.c.b16 %v458, %v454
    %v583 = vpack.c.b16 %v459, %v455
    %v584 = vpack.c.b16 %v460, %v456
    %v585 = vpack.c.b16 %v465, %v461
    %v586 = vpack.c.b16 %v466, %v462
    %v587 = vpack.c.b16 %v467, %v463
    %v588 = vpack.c.b16 %v468, %v464
    %v589 = vpack.c.b16 %v473, %v469
    %v590 = vpack.c.b16 %v474, %v470
    %v591 = vpack.c.b16 %v475, %v471
    %v592 = vpack.c.b16 %v476, %v472
    %v593 = vpack.c.b16 %v481, %v477
    %v594 = vpack.c.b16 %v482, %v478
    %v595 = vpack.c.b16 %v483, %v479
    %v596 = vpack.c.b16 %v484, %v480
    %v597 = vpack.c.b16 %v489, %v485
    %v598 = vpack.c.b16 %v490, %v486
    %v599 = vpack.c.b16 %v491, %v487
    %v600 = vpack.c.b16 %v492, %v488
    %v601 = vpack.c.b16 %v497, %v493
    %v602 = vpack.c.b16 %v498, %v494
    %v603 = vpack.c.b16 %v499, %v495
    %v604 = vpack.c.b16 %v500, %v496
    %v605 = vpack.c.b16 %v505, %v501
    %v606 = vpack.c.b16 %v506, %v502
    %v607 = vpack.c.b16 %v507, %v503
    %v608 = vpack.c.b16 %v508, %v504
    %v609 = vpack.c.b16 %v513, %v509
    %v610 = vpack.c.b16 %v514, %v510
    %v611 = vpack.c.b16 %v515, %v511
    %v612 = vpack.c.b16 %v516, %v512
    %v613 = vpack.c.b16 %v521, %v517
    %v614 = vpack.c.b16 %v522, %v518
    %v615 = vpack.c.b16 %v523, %v519
    %v616 = vpack.c.b16 %v524, %v520
    %v617 = vpack.c.b16 %v529, %v525
    %v618 = vpack.c.b16 %v530, %v526
    %v619 = vpack.c.b16 %v531, %v527
    %v620 = vpack.c.b16 %v532, %v528
    %v621 = vpack.c.b16 %v537, %v533
    %v622 = vpack.c.b16 %v538, %v534
    %v623 = vpack.c.b16 %v539, %v535
    %v624 = vpack.c.b16 %v540, %v536
    %v625 = vpack.c.b16 %v545, %v541
    %v626 = vpack.c.b16 %v546, %v542
    %v627 = vpack.c.b16 %v547, %v543
    %v628 = vpack.c.b16 %v548, %v544
    %v629 = vpack.c.b16 %v553, %v549
    %v630 = vpack.c.b16 %v554, %v550
    %v631 = vpack.c.b16 %v555, %v551
    %v632 = vpack.c.b16 %v556, %v552
    %v633 = vpack.c.b16 %v561, %v557
    %v634 = vpack.c.b16 %v562, %v558
    %v635 = vpack.c.b16 %v563, %v559
    %v636 = vpack.c.b16 %v564, %v560
    %v637 = vpack.c.b16 %v569, %v565
    %v638 = vpack.c.b16 %v570, %v566
    %v639 = vpack.c.b16 %v571, %v567
    %v640 = vpack.c.b16 %v572, %v568
    %v641 = vpack.c.b16 %v577, %v573
    %v642 = vpack.c.b16 %v578, %v574
    %v643 = vpack.c.b16 %v579, %v575
    %v644 = vpack.c.b16 %v580, %v576
    %709 = vmatprep.subr.bf16.mxu0 %v582
    %710 = vmatpush1.bf16.msra.mxu0 %v581
    %711 = vmatprep.subr.bf16.mxu0 %v586
    %712 = vmatpush1.bf16.msra.mxu0 %v585
    %713 = vmatprep.subr.bf16.mxu0 %v590
    %714 = vmatpush1.bf16.msra.mxu0 %v589
    %715 = vmatprep.subr.bf16.mxu0 %v594
    %716 = vmatpush1.bf16.msra.mxu0 %v593
    %717 = vmatprep.subr.bf16.mxu0 %v598
    %718 = vmatpush1.bf16.msra.mxu0 %v597
    %719 = vmatprep.subr.bf16.mxu0 %v602
    %720 = vmatpush1.bf16.msra.mxu0 %v601
    %721 = vmatprep.subr.bf16.mxu0 %v606
    %722 = vmatpush1.bf16.msra.mxu0 %v605
    %723 = vmatprep.subr.bf16.mxu0 %v610
    %724 = vmatpush1.bf16.msra.mxu0 %v609
    %725 = vmatprep.subr.bf16.mxu0 %v614
    %726 = vmatpush1.bf16.msra.mxu0 %v613
    %727 = vmatprep.subr.bf16.mxu0 %v618
    %728 = vmatpush1.bf16.msra.mxu0 %v617
    %729 = vmatprep.subr.bf16.mxu0 %v622
    %730 = vmatpush1.bf16.msra.mxu0 %v621
    %731 = vmatprep.subr.bf16.mxu0 %v626
    %732 = vmatpush1.bf16.msra.mxu0 %v625
    %733 = vmatprep.subr.bf16.mxu0 %v630
    %734 = vmatpush1.bf16.msra.mxu0 %v629
    %735 = vmatprep.subr.bf16.mxu0 %v634
    %736 = vmatpush1.bf16.msra.mxu0 %v633
    %737 = vmatprep.subr.bf16.mxu0 %v638
    %738 = vmatpush1.bf16.msra.mxu0 %v637
    %739 = vmatprep.subr.bf16.mxu0 %v642
    %740 = vmatpush1.bf16.msra.mxu0 %v641
    %741 = vmatprep.mubr.bf16.mxu0 %v302
    %742 = vmatmul.mubr.bf16.gmra.mrb[0].mxu0 %v301
    %v743 = vpop.f32.mrb[0].mxu0
    %v744 = vadd.f32 %v372, %v743
    %v745 = vpop.f32.mrb[0].mxu0
    %v746 = vadd.f32 %v376, %v745
    %v747 = vpop.f32.mrb[0].mxu0
    %v748 = vpop.f32.mrb[0].mxu0
    %749 = vdwg.mxu0
    %750 = vmatprep.subr.bf16.mxu0 %v584
    %751 = vmatpush1.bf16.msra.mxu0 %v583
    %752 = vmatprep.subr.bf16.mxu0 %v588
    %753 = vmatpush1.bf16.msra.mxu0 %v587
    %754 = vmatprep.subr.bf16.mxu0 %v592
    %755 = vmatpush1.bf16.msra.mxu0 %v591
    %756 = vmatprep.subr.bf16.mxu0 %v596
    %757 = vmatpush1.bf16.msra.mxu0 %v595
    %758 = vmatprep.subr.bf16.mxu0 %v600
    %759 = vmatpush1.bf16.msra.mxu0 %v599
    %760 = vmatprep.subr.bf16.mxu0 %v604
    %761 = vmatpush1.bf16.msra.mxu0 %v603
    %762 = vmatprep.subr.bf16.mxu0 %v608
    %763 = vmatpush1.bf16.msra.mxu0 %v607
    %764 = vmatprep.subr.bf16.mxu0 %v612
    %765 = vmatpush1.bf16.msra.mxu0 %v611
    %766 = vmatprep.subr.bf16.mxu0 %v616
    %767 = vmatpush1.bf16.msra.mxu0 %v615
    %768 = vmatprep.subr.bf16.mxu0 %v620
    %769 = vmatpush1.bf16.msra.mxu0 %v619
    %770 = vmatprep.subr.bf16.mxu0 %v624
    %771 = vmatpush1.bf16.msra.mxu0 %v623
    %772 = vmatprep.subr.bf16.mxu0 %v628
    %773 = vmatpush1.bf16.msra.mxu0 %v627
    %774 = vmatprep.subr.bf16.mxu0 %v632
    %775 = vmatpush1.bf16.msra.mxu0 %v631
    %776 = vmatprep.subr.bf16.mxu0 %v636
    %777 = vmatpush1.bf16.msra.mxu0 %v635
    %778 = vmatprep.subr.bf16.mxu0 %v640
    %779 = vmatpush1.bf16.msra.mxu0 %v639
    %780 = vmatprep.subr.bf16.mxu0 %v644
    %781 = vmatpush1.bf16.msra.mxu0 %v643
    %782 = vmatprep.mubr.bf16.mxu0 %v302
    %783 = vmatmul.mubr.bf16.gmra.mrb[0].mxu0 %v301
    %v784 = vpop.f32.mrb[0].mxu0
    %v785 = vadd.f32 %v380, %v784
    %v786 = vpop.f32.mrb[0].mxu0
    %v787 = vadd.f32 %v384, %v786
    %v788 = vpop.f32.mrb[0].mxu0
    %v789 = vpop.f32.mrb[0].mxu0
    %790 = vdwg.mxu0
    %v791 = vmax.f32 %v744, 0.0
    %v792 = vmax.f32 %v746, 0.0
    %v793 = vmax.f32 %v785, 0.0
    %v794 = vmax.f32 %v787, 0.0
    %v795 = vpack.c.bf16 %v791, %v791
    %v796 = vpack.c.bf16 %v792, %v792
    %v797 = vpack.c.bf16 %v793, %v793
    %v798 = vpack.c.bf16 %v794, %v794
    %v799 = vld [vmem:[#allocation8] sm:$0xf]
    %v800 = vld [vmem:[#allocation8 + $0x4] sm:$0xf]
    %v801 = vld [vmem:[#allocation8 + $0x8] sm:$0xf]
    %v802 = vld [vmem:[#allocation8 + $0xc] sm:$0xf]
    %v803 = vld [vmem:[#allocation8 + $0x10] sm:$0xf]
    %v804 = vld [vmem:[#allocation8 + $0x14] sm:$0xf]
    %v805 = vld [vmem:[#allocation8 + $0x18] sm:$0xf]
    %v806 = vld [vmem:[#allocation8 + $0x1c] sm:$0xf]
    %v807 = vld [vmem:[#allocation8 + $0x20] sm:$0xf]
    %v808 = vld [vmem:[#allocation8 + $0x24] sm:$0xf]
    %v809 = vld [vmem:[#allocation8 + $0x28] sm:$0xf]
    %v810 = vld [vmem:[#allocation8 + $0x2c] sm:$0xf]
    %v811 = vld [vmem:[#allocation8 + $0x30] sm:$0xf]
    %v812 = vld [vmem:[#allocation8 + $0x34] sm:$0xf]
    %v813 = vld [vmem:[#allocation8 + $0x38] sm:$0xf]
    %v814 = vld [vmem:[#allocation8 + $0x3c] sm:$0xf]
    %v815 = vld [vmem:[#allocation8 + $0x40] sm:$0xf]
    %v816 = vld [vmem:[#allocation8 + $0x44] sm:$0xf]
    %v817 = vld [vmem:[#allocation8 + $0x48] sm:$0xf]
    %v818 = vld [vmem:[#allocation8 + $0x4c] sm:$0xf]
    %v819 = vld [vmem:[#allocation8 + $0x50] sm:$0xf]
    %v820 = vld [vmem:[#allocation8 + $0x54] sm:$0xf]
    %v821 = vld [vmem:[#allocation8 + $0x58] sm:$0xf]
    %v822 = vld [vmem:[#allocation8 + $0x5c] sm:$0xf]
    %v823 = vld [vmem:[#allocation8 + $0x60] sm:$0xf]
    %v824 = vld [vmem:[#allocation8 + $0x64] sm:$0xf]
    %v825 = vld [vmem:[#allocation8 + $0x68] sm:$0xf]
    %v826 = vld [vmem:[#allocation8 + $0x6c] sm:$0xf]
    %v827 = vld [vmem:[#allocation8 + $0x70] sm:$0xf]
    %v828 = vld [vmem:[#allocation8 + $0x74] sm:$0xf]
    %v829 = vld [vmem:[#allocation8 + $0x78] sm:$0xf]
    %v830 = vld [vmem:[#allocation8 + $0x7c] sm:$0xf]
    %v831 = vld [vmem:[#allocation8 + $0x80] sm:$0xf]
    %v832 = vld [vmem:[#allocation8 + $0x84] sm:$0xf]
    %v833 = vld [vmem:[#allocation8 + $0x88] sm:$0xf]
    %v834 = vld [vmem:[#allocation8 + $0x8c] sm:$0xf]
    %v835 = vld [vmem:[#allocation8 + $0x90] sm:$0xf]
    %v836 = vld [vmem:[#allocation8 + $0x94] sm:$0xf]
    %v837 = vld [vmem:[#allocation8 + $0x98] sm:$0xf]
    %v838 = vld [vmem:[#allocation8 + $0x9c] sm:$0xf]
    %v839 = vld [vmem:[#allocation8 + $0xa0] sm:$0xf]
    %v840 = vld [vmem:[#allocation8 + $0xa4] sm:$0xf]
    %v841 = vld [vmem:[#allocation8 + $0xa8] sm:$0xf]
    %v842 = vld [vmem:[#allocation8 + $0xac] sm:$0xf]
    %v843 = vld [vmem:[#allocation8 + $0xb0] sm:$0xf]
    %v844 = vld [vmem:[#allocation8 + $0xb4] sm:$0xf]
    %v845 = vld [vmem:[#allocation8 + $0xb8] sm:$0xf]
    %v846 = vld [vmem:[#allocation8 + $0xbc] sm:$0xf]
    %v847 = vld [vmem:[#allocation8 + $0xc0] sm:$0xf]
    %v848 = vld [vmem:[#allocation8 + $0xc4] sm:$0xf]
    %v849 = vld [vmem:[#allocation8 + $0xc8] sm:$0xf]
    %v850 = vld [vmem:[#allocation8 + $0xcc] sm:$0xf]
    %v851 = vld [vmem:[#allocation8 + $0xd0] sm:$0xf]
    %v852 = vld [vmem:[#allocation8 + $0xd4] sm:$0xf]
    %v853 = vld [vmem:[#allocation8 + $0xd8] sm:$0xf]
    %v854 = vld [vmem:[#allocation8 + $0xdc] sm:$0xf]
    %v855 = vld [vmem:[#allocation8 + $0xe0] sm:$0xf]
    %v856 = vld [vmem:[#allocation8 + $0xe4] sm:$0xf]
    %v857 = vld [vmem:[#allocation8 + $0xe8] sm:$0xf]
    %v858 = vld [vmem:[#allocation8 + $0xec] sm:$0xf]
    %v859 = vld [vmem:[#allocation8 + $0xf0] sm:$0xf]
    %v860 = vld [vmem:[#allocation8 + $0xf4] sm:$0xf]
    %v861 = vld [vmem:[#allocation8 + $0xf8] sm:$0xf]
    %v862 = vld [vmem:[#allocation8 + $0xfc] sm:$0xf]
    %v863 = vld [vmem:[%s6] sm:$0x1]
    %v865 = vlaneseq
    %v866 = vshrl.u32 %v865, 7
    %v867 = vsub.s32 0, %v866
    %v868 = vrot.slane %v863, %v867
    %v934 = vunpack.c.l.b16 %v799
    %v935 = vunpack.c.l.b16 %v800
    %v936 = vunpack.c.l.b16 %v801
    %v937 = vunpack.c.l.b16 %v802
    %v938 = vunpack.c.l.b16 %v803
    %v939 = vunpack.c.l.b16 %v804
    %v940 = vunpack.c.l.b16 %v805
    %v941 = vunpack.c.l.b16 %v806
    %v942 = vunpack.c.l.b16 %v807
    %v943 = vunpack.c.l.b16 %v808
    %v944 = vunpack.c.l.b16 %v809
    %v945 = vunpack.c.l.b16 %v810
    %v946 = vunpack.c.l.b16 %v811
    %v947 = vunpack.c.l.b16 %v812
    %v948 = vunpack.c.l.b16 %v813
    %v949 = vunpack.c.l.b16 %v814
    %v950 = vunpack.c.l.b16 %v815
    %v951 = vunpack.c.l.b16 %v816
    %v952 = vunpack.c.l.b16 %v817
    %v953 = vunpack.c.l.b16 %v818
    %v954 = vunpack.c.l.b16 %v819
    %v955 = vunpack.c.l.b16 %v820
    %v956 = vunpack.c.l.b16 %v821
    %v957 = vunpack.c.l.b16 %v822
    %v958 = vunpack.c.l.b16 %v823
    %v959 = vunpack.c.l.b16 %v824
    %v960 = vunpack.c.l.b16 %v825
    %v961 = vunpack.c.l.b16 %v826
    %v962 = vunpack.c.l.b16 %v827
    %v963 = vunpack.c.l.b16 %v828
    %v964 = vunpack.c.l.b16 %v829
    %v965 = vunpack.c.l.b16 %v830
    %v966 = vunpack.c.l.b16 %v831
    %v967 = vunpack.c.l.b16 %v832
    %v968 = vunpack.c.l.b16 %v833
    %v969 = vunpack.c.l.b16 %v834
    %v970 = vunpack.c.l.b16 %v835
    %v971 = vunpack.c.l.b16 %v836
    %v972 = vunpack.c.l.b16 %v837
    %v973 = vunpack.c.l.b16 %v838
    %v974 = vunpack.c.l.b16 %v839
    %v975 = vunpack.c.l.b16 %v840
    %v976 = vunpack.c.l.b16 %v841
    %v977 = vunpack.c.l.b16 %v842
    %v978 = vunpack.c.l.b16 %v843
    %v979 = vunpack.c.l.b16 %v844
    %v980 = vunpack.c.l.b16 %v845
    %v981 = vunpack.c.l.b16 %v846
    %v982 = vunpack.c.l.b16 %v847
    %v983 = vunpack.c.l.b16 %v848
    %v984 = vunpack.c.l.b16 %v849
    %v985 = vunpack.c.l.b16 %v850
    %v986 = vunpack.c.l.b16 %v851
    %v987 = vunpack.c.l.b16 %v852
    %v988 = vunpack.c.l.b16 %v853
    %v989 = vunpack.c.l.b16 %v854
    %v990 = vunpack.c.l.b16 %v855
    %v991 = vunpack.c.l.b16 %v856
    %v992 = vunpack.c.l.b16 %v857
    %v993 = vunpack.c.l.b16 %v858
    %v994 = vunpack.c.l.b16 %v859
    %v995 = vunpack.c.l.b16 %v860
    %v996 = vunpack.c.l.b16 %v861
    %v997 = vunpack.c.l.b16 %v862
    %v998 = vpack.c.b16 %v935, %v934
    %v999 = vpack.c.b16 %v937, %v936
    %v1000 = vpack.c.b16 %v939, %v938
    %v1001 = vpack.c.b16 %v941, %v940
    %v1002 = vpack.c.b16 %v943, %v942
    %v1003 = vpack.c.b16 %v945, %v944
    %v1004 = vpack.c.b16 %v947, %v946
    %v1005 = vpack.c.b16 %v949, %v948
    %v1006 = vpack.c.b16 %v951, %v950
    %v1007 = vpack.c.b16 %v953, %v952
    %v1008 = vpack.c.b16 %v955, %v954
    %v1009 = vpack.c.b16 %v957, %v956
    %v1010 = vpack.c.b16 %v959, %v958
    %v1011 = vpack.c.b16 %v961, %v960
    %v1012 = vpack.c.b16 %v963, %v962
    %v1013 = vpack.c.b16 %v965, %v964
    %v1014 = vpack.c.b16 %v967, %v966
    %v1015 = vpack.c.b16 %v969, %v968
    %v1016 = vpack.c.b16 %v971, %v970
    %v1017 = vpack.c.b16 %v973, %v972
    %v1018 = vpack.c.b16 %v975, %v974
    %v1019 = vpack.c.b16 %v977, %v976
    %v1020 = vpack.c.b16 %v979, %v978
    %v1021 = vpack.c.b16 %v981, %v980
    %v1022 = vpack.c.b16 %v983, %v982
    %v1023 = vpack.c.b16 %v985, %v984
    %v1024 = vpack.c.b16 %v987, %v986
    %v1025 = vpack.c.b16 %v989, %v988
    %v1026 = vpack.c.b16 %v991, %v990
    %v1027 = vpack.c.b16 %v993, %v992
    %v1028 = vpack.c.b16 %v995, %v994
    %v1029 = vpack.c.b16 %v997, %v996
    %1062 = vmatprep.subr.bf16.mxu0 0
    %1063 = vmatpush1.bf16.msra.mxu0 %v998
    %1064 = vmatprep.subr.bf16.mxu0 0
    %1065 = vmatpush1.bf16.msra.mxu0 %v999
    %1066 = vmatprep.subr.bf16.mxu0 0
    %1067 = vmatpush1.bf16.msra.mxu0 %v1000
    %1068 = vmatprep.subr.bf16.mxu0 0
    %1069 = vmatpush1.bf16.msra.mxu0 %v1001
    %1070 = vmatprep.subr.bf16.mxu0 0
    %1071 = vmatpush1.bf16.msra.mxu0 %v1002
    %1072 = vmatprep.subr.bf16.mxu0 0
    %1073 = vmatpush1.bf16.msra.mxu0 %v1003
    %1074 = vmatprep.subr.bf16.mxu0 0
    %1075 = vmatpush1.bf16.msra.mxu0 %v1004
    %1076 = vmatprep.subr.bf16.mxu0 0
    %1077 = vmatpush1.bf16.msra.mxu0 %v1005
    %1078 = vmatprep.subr.bf16.mxu0 0
    %1079 = vmatpush1.bf16.msra.mxu0 %v1006
    %1080 = vmatprep.subr.bf16.mxu0 0
    %1081 = vmatpush1.bf16.msra.mxu0 %v1007
    %1082 = vmatprep.subr.bf16.mxu0 0
    %1083 = vmatpush1.bf16.msra.mxu0 %v1008
    %1084 = vmatprep.subr.bf16.mxu0 0
    %1085 = vmatpush1.bf16.msra.mxu0 %v1009
    %1086 = vmatprep.subr.bf16.mxu0 0
    %1087 = vmatpush1.bf16.msra.mxu0 %v1010
    %1088 = vmatprep.subr.bf16.mxu0 0
    %1089 = vmatpush1.bf16.msra.mxu0 %v1011
    %1090 = vmatprep.subr.bf16.mxu0 0
    %1091 = vmatpush1.bf16.msra.mxu0 %v1012
    %1092 = vmatprep.subr.bf16.mxu0 0
    %1093 = vmatpush1.bf16.msra.mxu0 %v1013
    %1094 = vmatprep.mubr.bf16.mxu0 %v796
    %1095 = vmatmul.mubr.bf16.gmra.mrb[0].mxu0 %v795
    %v1096 = vpop.f32.mrb[0].mxu0
    %v1097 = vadd.f32 %v868, %v1096
    %v1098 = vpop.f32.mrb[0].mxu0
    %v1099 = vpop.f32.mrb[0].mxu0
    %v1100 = vpop.f32.mrb[0].mxu0
    %1101 = vdwg.mxu0
    %1102 = vmatprep.subr.bf16.mxu0 0
    %1103 = vmatpush1.bf16.msra.mxu0 %v1014
    %1104 = vmatprep.subr.bf16.mxu0 0
    %1105 = vmatpush1.bf16.msra.mxu0 %v1015
    %1106 = vmatprep.subr.bf16.mxu0 0
    %1107 = vmatpush1.bf16.msra.mxu0 %v1016
    %1108 = vmatprep.subr.bf16.mxu0 0
    %1109 = vmatpush1.bf16.msra.mxu0 %v1017
    %1110 = vmatprep.subr.bf16.mxu0 0
    %1111 = vmatpush1.bf16.msra.mxu0 %v1018
    %1112 = vmatprep.subr.bf16.mxu0 0
    %1113 = vmatpush1.bf16.msra.mxu0 %v1019
    %1114 = vmatprep.subr.bf16.mxu0 0
    %1115 = vmatpush1.bf16.msra.mxu0 %v1020
    %1116 = vmatprep.subr.bf16.mxu0 0
    %1117 = vmatpush1.bf16.msra.mxu0 %v1021
    %1118 = vmatprep.subr.bf16.mxu0 0
    %1119 = vmatpush1.bf16.msra.mxu0 %v1022
    %1120 = vmatprep.subr.bf16.mxu0 0
    %1121 = vmatpush1.bf16.msra.mxu0 %v1023
    %1122 = vmatprep.subr.bf16.mxu0 0
    %1123 = vmatpush1.bf16.msra.mxu0 %v1024
    %1124 = vmatprep.subr.bf16.mxu0 0
    %1125 = vmatpush1.bf16.msra.mxu0 %v1025
    %1126 = vmatprep.subr.bf16.mxu0 0
    %1127 = vmatpush1.bf16.msra.mxu0 %v1026
    %1128 = vmatprep.subr.bf16.mxu0 0
    %1129 = vmatpush1.bf16.msra.mxu0 %v1027
    %1130 = vmatprep.subr.bf16.mxu0 0
    %1131 = vmatpush1.bf16.msra.mxu0 %v1028
    %1132 = vmatprep.subr.bf16.mxu0 0
    %1133 = vmatpush1.bf16.msra.mxu0 %v1029
    %1134 = vmatprep.mubr.bf16.mxu0 %v798
    %1135 = vmatmul.mubr.bf16.gmra.mrb[0].mxu0 %v797
    %v1136 = vpop.f32.mrb[0].mxu0
    %v1137 = vadd.f32 %v1097, %v1136
    %v1138 = vpop.f32.mrb[0].mxu0
    %v1139 = vpop.f32.mrb[0].mxu0
    %v1140 = vpop.f32.mrb[0].mxu0
    %1141 = vdwg.mxu0
    %1142 = vst [vmem:[#allocation10] sm:$0xff] %v1137
    // Predicated region
    $region46: #{tpu_custom_call.1} parent=1 // pred_check
      _
    $region47: #{tpu_custom_call.1} parent=1 // pred_check_branch
      %1144 = sbr.rel (0) target = $region49
    $region48: #{tpu_custom_call.1} parent=1 // pred_region
      %s1146 = ssub.s32 128, 128
      %1147 = vsyncadd [#allocation4], %s1146
      %s1149 = sshll.u32 [#allocation10], 4
      %s1150 = int_to_ptr.vmem [resolvable:$true] %s1149
      %1152 = dma.vmem_to_hbm [thread:$0]  %s1150, 128, %s7, [#allocation4]
    $region49: #{tpu_custom_call.1} parent=1 // pred_fallthru
      _
    // Predicated region
    $region50: #{tpu_custom_call.1} parent=1 // pred_check
      _
    $region51: #{tpu_custom_call.1} parent=1 // pred_check_branch
      %1154 = sbr.rel (0) target = $region53
    $region52: #{tpu_custom_call.1} parent=1 // pred_region
      %1155 = dma.done [#allocation4], 128
    $region53: #{tpu_custom_call.1} parent=1 // pred_fallthru
      _
    %1156 = vsyncpa [#allocation3], 1
    %1157 = vsyncpa [#allocation6], 1
    %1158 = vsyncpa [#allocation9], 1
    %1159 = vsyncpa [#allocation4], 1

// kernel: tpu_custom_call.1
$region0: #{tpu_custom_call.1}
  #allocation0 [shape = 'u32[]', space=smem, size = 0x4, offset = 0x4, fixed_abs, tag = 'smem constant byte address 0x4 - core index']
  #allocation1 [shape = 'u32[144,128]{1,0:T(1,128)}', space=vmem, size = 0x12000, scoped, tag = 'internal scratch']
  %s0 = inlined_call_operand.hbm [shape: f32[8,200], index: 0, kind: input, shape index: {}]
  %s1 = inlined_call_operand.hbm [shape: bf16[200,256], index: 1, kind: input, shape index: {}]
  %s2 = inlined_call_operand.vmem [shape: f32[1,256], index: 2, kind: input, shape index: {}]
  %s3 = inlined_call_operand.hbm [shape: bf16[256,512], index: 3, kind: input, shape index: {}]
  %s4 = inlined_call_operand.vmem [shape: f32[1,512], index: 4, kind: input, shape index: {}]
  %s5 = inlined_call_operand.hbm [shape: bf16[512,128], index: 5, kind: input, shape index: {}]
  %s6 = inlined_call_operand.vmem [shape: f32[1,128], index: 6, kind: input, shape index: {}]
  %s7 = inlined_call_operand.hbm [shape: f32[8,128], index: 7, kind: output, shape index: {}]
  %s8 = sld [smem:[#allocation0]]
  $region54: #{tpu_custom_call.1} parent=0
    _
  %s10 = ssub.s32 1, %s8
  %s11 = scalar_select 0, %s10, %s8
  $region1: #{tpu_custom_call.1} parent=0
    #allocation2 [shape = 'u8[8192]{0}', space=vmem, size = 0x2000, scoped, tag = 'input window, operand 0, single buffered']
    #allocation3 [shape = 's32[1]{0}', space=sflag, size = 0x4, scoped, tag = 'scoped memory for tpu_custom_call.1']
    #allocation4 [shape = 's32[1]{0}', space=sflag, size = 0x4, scoped, tag = 'scoped memory for tpu_custom_call.1']
    #allocation5 [shape = 'u8[102400]{0}', space=vmem, size = 0x19000, scoped, tag = 'input window, operand 1, single buffered']
    #allocation6 [shape = 's32[1]{0}', space=sflag, size = 0x4, scoped, tag = 'scoped memory for tpu_custom_call.1']
    #allocation7 [shape = 'u8[262144]{0}', space=vmem, size = 0x40000, scoped, tag = 'input window, operand 3, single buffered']
    #allocation8 [shape = 'u8[131072]{0}', space=vmem, size = 0x20000, scoped, tag = 'input window, operand 5, single buffered']
    #allocation9 [shape = 's32[1]{0}', space=sflag, size = 0x4, scoped, tag = 'scoped memory for tpu_custom_call.1']
    #allocation10 [shape = 'u8[4096]{0}', space=vmem, size = 0x1000, scoped, tag = 'output window, operand 0, single buffered']
    %12 = vsyncpa [#allocation3], 0
    %13 = vsyncpa [#allocation6], 0
    %14 = vsyncpa [#allocation9], 0
    %15 = vsyncpa [#allocation4], 0
    // Predicated region
    $region2: #{tpu_custom_call.1} parent=1 // pred_check
      _
    $region3: #{tpu_custom_call.1} parent=1 // pred_check_branch
      %17 = sbr.rel (0) target = $region5
    $region4: #{tpu_custom_call.1} parent=1 // pred_region
      %s19 = ssub.s32 256, 256
      %20 = vsyncadd [#allocation3], %s19
      %s22 = sshll.u32 [#allocation2], 4
      %s23 = int_to_ptr.vmem [resolvable:$true] %s22
      %25 = dma.hbm_to_vmem [thread:$0]  %s0, 256, %s23, [#allocation3]
    $region5: #{tpu_custom_call.1} parent=1 // pred_fallthru
      _
    // Predicated region
    $region6: #{tpu_custom_call.1} parent=1 // pred_check
      _
    $region7: #{tpu_custom_call.1} parent=1 // pred_check_branch
      %27 = sbr.rel (0) target = $region9
    $region8: #{tpu_custom_call.1} parent=1 // pred_region
      %s29 = ssub.s32 3200, 3200
      %30 = vsyncadd [#allocation6], %s29
      %s31 = sshll.u32 [#allocation5], 4
      %s32 = int_to_ptr.vmem [resolvable:$true] %s31
      %37 = dma.hbm_to_vmem [thread:$0]  %s1, 3200, %s32, [#allocation6], 128, 128, 8
    $region9: #{tpu_custom_call.1} parent=1 // pred_fallthru
      _
    // Predicated region
    $region10: #{tpu_custom_call.1} parent=1 // pred_check
      _
    $region11: #{tpu_custom_call.1} parent=1 // pred_check_branch
      %39 = sbr.rel (0) target = $region13
    $region12: #{tpu_custom_call.1} parent=1 // pred_region
      _
    $region13: #{tpu_custom_call.1} parent=1 // pred_fallthru
      _
    // Predicated region
    $region14: #{tpu_custom_call.1} parent=1 // pred_check
      _
    $region15: #{tpu_custom_call.1} parent=1 // pred_check_branch
      %41 = sbr.rel (0) target = $region17
    $region16: #{tpu_custom_call.1} parent=1 // pred_region
      %s43 = ssub.s32 8192, 8192
      %44 = vsyncadd [#allocation6], %s43
      %s45 = sshll.u32 [#allocation7], 4
      %s46 = int_to_ptr.vmem [resolvable:$true] %s45
      %51 = dma.hbm_to_vmem [thread:$0]  %s3, 8192, %s46, [#allocation6], 256, 256, 16
    $region17: #{tpu_custom_call.1} parent=1 // pred_fallthru
      _
    // Predicated region
    $region18: #{tpu_custom_call.1} parent=1 // pred_check
      _
    $region19: #{tpu_custom_call.1} parent=1 // pred_check_branch
      %53 = sbr.rel (0) target = $region21
    $region20: #{tpu_custom_call.1} parent=1 // pred_region
      _
    $region21: #{tpu_custom_call.1} parent=1 // pred_fallthru
      _
    // Predicated region
    $region22: #{tpu_custom_call.1} parent=1 // pred_check
      _
    $region23: #{tpu_custom_call.1} parent=1 // pred_check_branch
      %55 = sbr.rel (0) target = $region25
    $region24: #{tpu_custom_call.1} parent=1 // pred_region
      %s57 = ssub.s32 4096, 4096
      %58 = vsyncadd [#allocation9], %s57
      %s59 = sshll.u32 [#allocation8], 4
      %s60 = int_to_ptr.vmem [resolvable:$true] %s59
      %65 = dma.hbm_to_vmem [thread:$0]  %s5, 4096, %s60, [#allocation9], 64, 64, 4
    $region25: #{tpu_custom_call.1} parent=1 // pred_fallthru
      _
    // Predicated region
    $region26: #{tpu_custom_call.1} parent=1 // pred_check
      _
    $region27: #{tpu_custom_call.1} parent=1 // pred_check_branch
      %67 = sbr.rel (0) target = $region29
    $region28: #{tpu_custom_call.1} parent=1 // pred_region
      _
    $region29: #{tpu_custom_call.1} parent=1 // pred_fallthru
      _
    // Predicated region
    $region30: #{tpu_custom_call.1} parent=1 // pred_check
      _
    $region31: #{tpu_custom_call.1} parent=1 // pred_check_branch
      %69 = sbr.rel (0) target = $region33
    $region32: #{tpu_custom_call.1} parent=1 // pred_region
      %70 = dma.done [#allocation3], 256
    $region33: #{tpu_custom_call.1} parent=1 // pred_fallthru
      _
    // Predicated region
    $region34: #{tpu_custom_call.1} parent=1 // pred_check
      _
    $region35: #{tpu_custom_call.1} parent=1 // pred_check_branch
      %72 = sbr.rel (0) target = $region37
    $region36: #{tpu_custom_call.1} parent=1 // pred_region
      %73 = dma.done [#allocation6], 3200
    $region37: #{tpu_custom_call.1} parent=1 // pred_fallthru
      _
    // Predicated region
    $region38: #{tpu_custom_call.1} parent=1 // pred_check
      _
    $region39: #{tpu_custom_call.1} parent=1 // pred_check_branch
      %75 = sbr.rel (0) target = $region41
    $region40: #{tpu_custom_call.1} parent=1 // pred_region
      %76 = dma.done [#allocation6], 8192
    $region41: #{tpu_custom_call.1} parent=1 // pred_fallthru
      _
    // Predicated region
    $region42: #{tpu_custom_call.1} parent=1 // pred_check
      _
    $region43: #{tpu_custom_call.1} parent=1 // pred_check_branch
      %78 = sbr.rel (0) target = $region45
    $region44: #{tpu_custom_call.1} parent=1 // pred_region
      %79 = dma.done [#allocation9], 4096
    $region45: #{tpu_custom_call.1} parent=1 // pred_fallthru
      _
    %v81 = vld [vmem:[#allocation2] sm:$0xff]
    %v82 = vld [vmem:[#allocation2 + $0x8] sm:$0xff]
    %v83 = vpack.c.bf16 %v81, %v81
    %v84 = vpack.c.bf16 %v82, %v82
    %v85 = vld [vmem:[#allocation5] sm:$0xff]
    %v86 = vld [vmem:[#allocation5 + $0x8] sm:$0xff]
    %v87 = vld [vmem:[#allocation5 + $0x10] sm:$0xff]
    %v88 = vld [vmem:[#allocation5 + $0x18] sm:$0xff]
    %v89 = vld [vmem:[#allocation5 + $0x20] sm:$0xff]
    %v90 = vld [vmem:[#allocation5 + $0x28] sm:$0xff]
    %v91 = vld [vmem:[#allocation5 + $0x30] sm:$0xff]
    %v92 = vld [vmem:[#allocation5 + $0x38] sm:$0xff]
    %v93 = vld [vmem:[#allocation5 + $0x40] sm:$0xff]
    %v94 = vld [vmem:[#allocation5 + $0x48] sm:$0xff]
    %v95 = vld [vmem:[#allocation5 + $0x50] sm:$0xff]
    %v96 = vld [vmem:[#allocation5 + $0x58] sm:$0xff]
    %v97 = vld [vmem:[#allocation5 + $0x60] sm:$0xff]
    %v98 = vld [vmem:[#allocation5 + $0x68] sm:$0xff]
    %v99 = vld [vmem:[#allocation5 + $0x70] sm:$0xff]
    %v100 = vld [vmem:[#allocation5 + $0x78] sm:$0xff]
    %v101 = vld [vmem:[#allocation5 + $0x80] sm:$0xff]
    %v102 = vld [vmem:[#allocation5 + $0x88] sm:$0xff]
    %v103 = vld [vmem:[#allocation5 + $0x90] sm:$0xff]
    %v104 = vld [vmem:[#allocation5 + $0x98] sm:$0xff]
    %v105 = vld [vmem:[#allocation5 + $0xa0] sm:$0xff]
    %v106 = vld [vmem:[#allocation5 + $0xa8] sm:$0xff]
    %v107 = vld [vmem:[#allocation5 + $0xb0] sm:$0xff]
    %v108 = vld [vmem:[#allocation5 + $0xb8] sm:$0xff]
    %v109 = vld [vmem:[#allocation5 + $0xc0] sm:$0xff]
    %v110 = vld [vmem:[%s2] sm:$0x3]
    %v112 = vlaneseq
    %v113 = vshrl.u32 %v112, 7
    %v114 = vsub.s32 0, %v113
    %v115 = vrot.slane %v110, %v114
    %v116 = vlaneseq
    %v117 = vshrl.u32 %v116, 7
    %v118 = vsub.s32 1, %v117
    %v119 = vrot.slane %v110, %v118
    %v147 = vunpack.c.l.b16 %v85
    %v148 = vunpack.c.h.b16 %v85
    %v149 = vunpack.c.l.b16 %v86
    %v150 = vunpack.c.h.b16 %v86
    %v151 = vunpack.c.l.b16 %v87
    %v152 = vunpack.c.h.b16 %v87
    %v153 = vunpack.c.l.b16 %v88
    %v154 = vunpack.c.h.b16 %v88
    %v155 = vunpack.c.l.b16 %v89
    %v156 = vunpack.c.h.b16 %v89
    %v157 = vunpack.c.l.b16 %v90
    %v158 = vunpack.c.h.b16 %v90
    %v159 = vunpack.c.l.b16 %v91
    %v160 = vunpack.c.h.b16 %v91
    %v161 = vunpack.c.l.b16 %v92
    %v162 = vunpack.c.h.b16 %v92
    %v163 = vunpack.c.l.b16 %v93
    %v164 = vunpack.c.h.b16 %v93
    %v165 = vunpack.c.l.b16 %v94
    %v166 = vunpack.c.h.b16 %v94
    %v167 = vunpack.c.l.b16 %v95
    %v168 = vunpack.c.h.b16 %v95
    %v169 = vunpack.c.l.b16 %v96
    %v170 = vunpack.c.h.b16 %v96
    %v171 = vunpack.c.l.b16 %v97
    %v172 = vunpack.c.h.b16 %v97
    %v173 = vunpack.c.l.b16 %v98
    %v174 = vunpack.c.h.b16 %v98
    %v175 = vunpack.c.l.b16 %v99
    %v176 = vunpack.c.h.b16 %v99
    %v177 = vunpack.c.l.b16 %v100
    %v178 = vunpack.c.h.b16 %v100
    %v179 = vunpack.c.l.b16 %v101
    %v180 = vunpack.c.h.b16 %v101
    %v181 = vunpack.c.l.b16 %v102
    %v182 = vunpack.c.h.b16 %v102
    %v183 = vunpack.c.l.b16 %v103
    %v184 = vunpack.c.h.b16 %v103
    %v185 = vunpack.c.l.b16 %v104
    %v186 = vunpack.c.h.b16 %v104
    %v187 = vunpack.c.l.b16 %v105
    %v188 = vunpack.c.h.b16 %v105
    %v189 = vunpack.c.l.b16 %v106
    %v190 = vunpack.c.h.b16 %v106
    %v191 = vunpack.c.l.b16 %v107
    %v192 = vunpack.c.h.b16 %v107
    %v193 = vunpack.c.l.b16 %v108
    %v194 = vunpack.c.h.b16 %v108
    %v195 = vunpack.c.l.b16 %v109
    %v196 = vunpack.c.h.b16 %v109
    %v197 = vpack.c.b16 %v149, %v147
    %v198 = vpack.c.b16 %v150, %v148
    %v199 = vpack.c.b16 %v153, %v151
    %v200 = vpack.c.b16 %v154, %v152
    %v201 = vpack.c.b16 %v157, %v155
    %v202 = vpack.c.b16 %v158, %v156
    %v203 = vpack.c.b16 %v161, %v159
    %v204 = vpack.c.b16 %v162, %v160
    %v205 = vpack.c.b16 %v165, %v163
    %v206 = vpack.c.b16 %v166, %v164
    %v207 = vpack.c.b16 %v169, %v167
    %v208 = vpack.c.b16 %v170, %v168
    %v209 = vpack.c.b16 %v173, %v171
    %v210 = vpack.c.b16 %v174, %v172
    %v211 = vpack.c.b16 %v177, %v175
    %v212 = vpack.c.b16 %v178, %v176
    %v213 = vpack.c.b16 %v181, %v179
    %v214 = vpack.c.b16 %v182, %v180
    %v215 = vpack.c.b16 %v185, %v183
    %v216 = vpack.c.b16 %v186, %v184
    %v217 = vpack.c.b16 %v189, %v187
    %v218 = vpack.c.b16 %v190, %v188
    %v219 = vpack.c.b16 %v193, %v191
    %v220 = vpack.c.b16 %v194, %v192
    %v221 = vpack.c.b16 %v195, %v195
    %v222 = vpack.c.b16 %v196, %v196
    %vm247 = vcmask 588800
    %v249 = vsel %vm247, %v84, 0
    %vm251 = vcmask 1043456
    %v253 = vsel %vm251, %v221, 0
    %v256 = vsel %vm251, %v222, 0
    %258 = vmatprep.subr.bf16.mxu0 %v198
    %259 = vmatpush1.bf16.msra.mxu0 %v197
    %260 = vmatprep.subr.bf16.mxu0 %v200
    %261 = vmatpush1.bf16.msra.mxu0 %v199
    %262 = vmatprep.subr.bf16.mxu0 %v202
    %263 = vmatpush1.bf16.msra.mxu0 %v201
    %264 = vmatprep.subr.bf16.mxu0 %v204
    %265 = vmatpush1.bf16.msra.mxu0 %v203
    %266 = vmatprep.subr.bf16.mxu0 %v206
    %267 = vmatpush1.bf16.msra.mxu0 %v205
    %268 = vmatprep.subr.bf16.mxu0 %v208
    %269 = vmatpush1.bf16.msra.mxu0 %v207
    %270 = vmatprep.subr.bf16.mxu0 %v210
    %271 = vmatpush1.bf16.msra.mxu0 %v209
    %272 = vmatprep.subr.bf16.mxu0 %v212
    %273 = vmatpush1.bf16.msra.mxu0 %v211
    %274 = vmatprep.subr.bf16.mxu0 %v214
    %275 = vmatpush1.bf16.msra.mxu0 %v213
    %276 = vmatprep.subr.bf16.mxu0 %v216
    %277 = vmatpush1.bf16.msra.mxu0 %v215
    %278 = vmatprep.subr.bf16.mxu0 %v218
    %279 = vmatpush1.bf16.msra.mxu0 %v217
    %280 = vmatprep.subr.bf16.mxu0 %v220
    %281 = vmatpush1.bf16.msra.mxu0 %v219
    %282 = vmatprep.subr.bf16.mxu0 %v256
    %283 = vmatpush1.bf16.msra.mxu0 %v253
    %284 = vmatprep.subr.bf16.mxu0 0
    %285 = vmatpush1.bf16.msra.mxu0 0
    %286 = vmatprep.subr.bf16.mxu0 0
    %287 = vmatpush1.bf16.msra.mxu0 0
    %288 = vmatprep.subr.bf16.mxu0 0
    %289 = vmatpush1.bf16.msra.mxu0 0
    %290 = vmatprep.mubr.bf16.mxu0 %v249
    %291 = vmatmul.mubr.bf16.gmra.mrb[0].mxu0 %v83
    %v292 = vpop.f32.mrb[0].mxu0
    %v293 = vadd.f32 %v115, %v292
    %v294 = vpop.f32.mrb[0].mxu0
    %v295 = vadd.f32 %v119, %v294
    %v296 = vpop.f32.mrb[0].mxu0
    %v297 = vpop.f32.mrb[0].mxu0
    %298 = vdwg.mxu0
    %v299 = vmax.f32 %v293, 0.0
    %v300 = vmax.f32 %v295, 0.0
    %v301 = vpack.c.bf16 %v299, %v299
    %v302 = vpack.c.bf16 %v300, %v300
    %v303 = vld [vmem:[#allocation7] sm:$0xff]
    %v304 = vld [vmem:[#allocation7 + $0x8] sm:$0xff]
    %v305 = vld [vmem:[#allocation7 + $0x10] sm:$0xff]
    %v306 = vld [vmem:[#allocation7 + $0x18] sm:$0xff]
    %v307 = vld [vmem:[#allocation7 + $0x20] sm:$0xff]
    %v308 = vld [vmem:[#allocation7 + $0x28] sm:$0xff]
    %v309 = vld [vmem:[#allocation7 + $0x30] sm:$0xff]
    %v310 = vld [vmem:[#allocation7 + $0x38] sm:$0xff]
    %v311 = vld [vmem:[#allocation7 + $0x40] sm:$0xff]
    %v312 = vld [vmem:[#allocation7 + $0x48] sm:$0xff]
    %v313 = vld [vmem:[#allocation7 + $0x50] sm:$0xff]
    %v314 = vld [vmem:[#allocation7 + $0x58] sm:$0xff]
    %v315 = vld [vmem:[#allocation7 + $0x60] sm:$0xff]
    %v316 = vld [vmem:[#allocation7 + $0x68] sm:$0xff]
    %v317 = vld [vmem:[#allocation7 + $0x70] sm:$0xff]
    %v318 = vld [vmem:[#allocation7 + $0x78] sm:$0xff]
    %v319 = vld [vmem:[#allocation7 + $0x80] sm:$0xff]
    %v320 = vld [vmem:[#allocation7 + $0x88] sm:$0xff]
    %v321 = vld [vmem:[#allocation7 + $0x90] sm:$0xff]
    %v322 = vld [vmem:[#allocation7 + $0x98] sm:$0xff]
    %v323 = vld [vmem:[#allocation7 + $0xa0] sm:$0xff]
    %v324 = vld [vmem:[#allocation7 + $0xa8] sm:$0xff]
    %v325 = vld [vmem:[#allocation7 + $0xb0] sm:$0xff]
    %v326 = vld [vmem:[#allocation7 + $0xb8] sm:$0xff]
    %v327 = vld [vmem:[#allocation7 + $0xc0] sm:$0xff]
    %v328 = vld [vmem:[#allocation7 + $0xc8] sm:$0xff]
    %v329 = vld [vmem:[#allocation7 + $0xd0] sm:$0xff]
    %v330 = vld [vmem:[#allocation7 + $0xd8] sm:$0xff]
    %v331 = vld [vmem:[#allocation7 + $0xe0] sm:$0xff]
    %v332 = vld [vmem:[#allocation7 + $0xe8] sm:$0xff]
    %v333 = vld [vmem:[#allocation7 + $0xf0] sm:$0xff]
    %v334 = vld [vmem:[#allocation7 + $0xf8] sm:$0xff]
    %v335 = vld [vmem:[#allocation7 + $0x100] sm:$0xff]
    %v336 = vld [vmem:[#allocation7 + $0x108] sm:$0xff]
    %v337 = vld [vmem:[#allocation7 + $0x110] sm:$0xff]
    %v338 = vld [vmem:[#allocation7 + $0x118] sm:$0xff]
    %v339 = vld [vmem:[#allocation7 + $0x120] sm:$0xff]
    %v340 = vld [vmem:[#allocation7 + $0x128] sm:$0xff]
    %v341 = vld [vmem:[#allocation7 + $0x130] sm:$0xff]
    %v342 = vld [vmem:[#allocation7 + $0x138] sm:$0xff]
    %v343 = vld [vmem:[#allocation7 + $0x140] sm:$0xff]
    %v344 = vld [vmem:[#allocation7 + $0x148] sm:$0xff]
    %v345 = vld [vmem:[#allocation7 + $0x150] sm:$0xff]
    %v346 = vld [vmem:[#allocation7 + $0x158] sm:$0xff]
    %v347 = vld [vmem:[#allocation7 + $0x160] sm:$0xff]
    %v348 = vld [vmem:[#allocation7 + $0x168] sm:$0xff]
    %v349 = vld [vmem:[#allocation7 + $0x170] sm:$0xff]
    %v350 = vld [vmem:[#allocation7 + $0x178] sm:$0xff]
    %v351 = vld [vmem:[#allocation7 + $0x180] sm:$0xff]
    %v352 = vld [vmem:[#allocation7 + $0x188] sm:$0xff]
    %v353 = vld [vmem:[#allocation7 + $0x190] sm:$0xff]
    %v354 = vld [vmem:[#allocation7 + $0x198] sm:$0xff]
    %v355 = vld [vmem:[#allocation7 + $0x1a0] sm:$0xff]
    %v356 = vld [vmem:[#allocation7 + $0x1a8] sm:$0xff]
    %v357 = vld [vmem:[#allocation7 + $0x1b0] sm:$0xff]
    %v358 = vld [vmem:[#allocation7 + $0x1b8] sm:$0xff]
    %v359 = vld [vmem:[#allocation7 + $0x1c0] sm:$0xff]
    %v360 = vld [vmem:[#allocation7 + $0x1c8] sm:$0xff]
    %v361 = vld [vmem:[#allocation7 + $0x1d0] sm:$0xff]
    %v362 = vld [vmem:[#allocation7 + $0x1d8] sm:$0xff]
    %v363 = vld [vmem:[#allocation7 + $0x1e0] sm:$0xff]
    %v364 = vld [vmem:[#allocation7 + $0x1e8] sm:$0xff]
    %v365 = vld [vmem:[#allocation7 + $0x1f0] sm:$0xff]
    %v366 = vld [vmem:[#allocation7 + $0x1f8] sm:$0xff]
    %v367 = vld [vmem:[%s4] sm:$0xf]
    %v369 = vlaneseq
    %v370 = vshrl.u32 %v369, 7
    %v371 = vsub.s32 0, %v370
    %v372 = vrot.slane %v367, %v371
    %v373 = vlaneseq
    %v374 = vshrl.u32 %v373, 7
    %v375 = vsub.s32 1, %v374
    %v376 = vrot.slane %v367, %v375
    %v377 = vlaneseq
    %v378 = vshrl.u32 %v377, 7
    %v379 = vsub.s32 2, %v378
    %v380 = vrot.slane %v367, %v379
    %v381 = vlaneseq
    %v382 = vshrl.u32 %v381, 7
    %v383 = vsub.s32 3, %v382
    %v384 = vrot.slane %v367, %v383
    %v453 = vunpack.c.l.b16 %v303
    %v454 = vunpack.c.h.b16 %v303
    %v455 = vunpack.c.l.b16 %v304
    %v456 = vunpack.c.h.b16 %v304
    %v457 = vunpack.c.l.b16 %v305
    %v458 = vunpack.c.h.b16 %v305
    %v459 = vunpack.c.l.b16 %v306
    %v460 = vunpack.c.h.b16 %v306
    %v461 = vunpack.c.l.b16 %v307
    %v462 = vunpack.c.h.b16 %v307
    %v463 = vunpack.c.l.b16 %v308
    %v464 = vunpack.c.h.b16 %v308
    %v465 = vunpack.c.l.b16 %v309
    %v466 = vunpack.c.h.b16 %v309
    %v467 = vunpack.c.l.b16 %v310
    %v468 = vunpack.c.h.b16 %v310
    %v469 = vunpack.c.l.b16 %v311
    %v470 = vunpack.c.h.b16 %v311
    %v471 = vunpack.c.l.b16 %v312
    %v472 = vunpack.c.h.b16 %v312
    %v473 = vunpack.c.l.b16 %v313
    %v474 = vunpack.c.h.b16 %v313
    %v475 = vunpack.c.l.b16 %v314
    %v476 = vunpack.c.h.b16 %v314
    %v477 = vunpack.c.l.b16 %v315
    %v478 = vunpack.c.h.b16 %v315
    %v479 = vunpack.c.l.b16 %v316
    %v480 = vunpack.c.h.b16 %v316
    %v481 = vunpack.c.l.b16 %v317
    %v482 = vunpack.c.h.b16 %v317
    %v483 = vunpack.c.l.b16 %v318
    %v484 = vunpack.c.h.b16 %v318
    %v485 = vunpack.c.l.b16 %v319
    %v486 = vunpack.c.h.b16 %v319
    %v487 = vunpack.c.l.b16 %v320
    %v488 = vunpack.c.h.b16 %v320
    %v489 = vunpack.c.l.b16 %v321
    %v490 = vunpack.c.h.b16 %v321
    %v491 = vunpack.c.l.b16 %v322
    %v492 = vunpack.c.h.b16 %v322
    %v493 = vunpack.c.l.b16 %v323
    %v494 = vunpack.c.h.b16 %v323
    %v495 = vunpack.c.l.b16 %v324
    %v496 = vunpack.c.h.b16 %v324
    %v497 = vunpack.c.l.b16 %v325
    %v498 = vunpack.c.h.b16 %v325
    %v499 = vunpack.c.l.b16 %v326
    %v500 = vunpack.c.h.b16 %v326
    %v501 = vunpack.c.l.b16 %v327
    %v502 = vunpack.c.h.b16 %v327
    %v503 = vunpack.c.l.b16 %v328
    %v504 = vunpack.c.h.b16 %v328
    %v505 = vunpack.c.l.b16 %v329
    %v506 = vunpack.c.h.b16 %v329
    %v507 = vunpack.c.l.b16 %v330
    %v508 = vunpack.c.h.b16 %v330
    %v509 = vunpack.c.l.b16 %v331
    %v510 = vunpack.c.h.b16 %v331
    %v511 = vunpack.c.l.b16 %v332
    %v512 = vunpack.c.h.b16 %v332
    %v513 = vunpack.c.l.b16 %v333
    %v514 = vunpack.c.h.b16 %v333
    %v515 = vunpack.c.l.b16 %v334
    %v516 = vunpack.c.h.b16 %v334
    %v517 = vunpack.c.l.b16 %v335
    %v518 = vunpack.c.h.b16 %v335
    %v519 = vunpack.c.l.b16 %v336
    %v520 = vunpack.c.h.b16 %v336
    %v521 = vunpack.c.l.b16 %v337
    %v522 = vunpack.c.h.b16 %v337
    %v523 = vunpack.c.l.b16 %v338
    %v524 = vunpack.c.h.b16 %v338
    %v525 = vunpack.c.l.b16 %v339
    %v526 = vunpack.c.h.b16 %v339
    %v527 = vunpack.c.l.b16 %v340
    %v528 = vunpack.c.h.b16 %v340
    %v529 = vunpack.c.l.b16 %v341
    %v530 = vunpack.c.h.b16 %v341
    %v531 = vunpack.c.l.b16 %v342
    %v532 = vunpack.c.h.b16 %v342
    %v533 = vunpack.c.l.b16 %v343
    %v534 = vunpack.c.h.b16 %v343
    %v535 = vunpack.c.l.b16 %v344
    %v536 = vunpack.c.h.b16 %v344
    %v537 = vunpack.c.l.b16 %v345
    %v538 = vunpack.c.h.b16 %v345
    %v539 = vunpack.c.l.b16 %v346
    %v540 = vunpack.c.h.b16 %v346
    %v541 = vunpack.c.l.b16 %v347
    %v542 = vunpack.c.h.b16 %v347
    %v543 = vunpack.c.l.b16 %v348
    %v544 = vunpack.c.h.b16 %v348
    %v545 = vunpack.c.l.b16 %v349
    %v546 = vunpack.c.h.b16 %v349
    %v547 = vunpack.c.l.b16 %v350
    %v548 = vunpack.c.h.b16 %v350
    %v549 = vunpack.c.l.b16 %v351
    %v550 = vunpack.c.h.b16 %v351
    %v551 = vunpack.c.l.b16 %v352
    %v552 = vunpack.c.h.b16 %v352
    %v553 = vunpack.c.l.b16 %v353
    %v554 = vunpack.c.h.b16 %v353
    %v555 = vunpack.c.l.b16 %v354
    %v556 = vunpack.c.h.b16 %v354
    %v557 = vunpack.c.l.b16 %v355
    %v558 = vunpack.c.h.b16 %v355
    %v559 = vunpack.c.l.b16 %v356
    %v560 = vunpack.c.h.b16 %v356
    %v561 = vunpack.c.l.b16 %v357
    %v562 = vunpack.c.h.b16 %v357
    %v563 = vunpack.c.l.b16 %v358
    %v564 = vunpack.c.h.b16 %v358
    %v565 = vunpack.c.l.b16 %v359
    %v566 = vunpack.c.h.b16 %v359
    %v567 = vunpack.c.l.b16 %v360
    %v568 = vunpack.c.h.b16 %v360
    %v569 = vunpack.c.l.b16 %v361
    %v570 = vunpack.c.h.b16 %v361
    %v571 = vunpack.c.l.b16 %v362
    %v572 = vunpack.c.h.b16 %v362
    %v573 = vunpack.c.l.b16 %v363
    %v574 = vunpack.c.h.b16 %v363
    %v575 = vunpack.c.l.b16 %v364
    %v576 = vunpack.c.h.b16 %v364
    %v577 = vunpack.c.l.b16 %v365
    %v578 = vunpack.c.h.b16 %v365
    %v579 = vunpack.c.l.b16 %v366
    %v580 = vunpack.c.h.b16 %v366
    %v581 = vpack.c.b16 %v457, %v453
    %v582 = vpack.c.b16 %v458, %v454
    %v583 = vpack.c.b16 %v459, %v455
    %v584 = vpack.c.b16 %v460, %v456
    %v585 = vpack.c.b16 %v465, %v461
    %v586 = vpack.c.b16 %v466, %v462
    %v587 = vpack.c.b16 %v467, %v463
    %v588 = vpack.c.b16 %v468, %v464
    %v589 = vpack.c.b16 %v473, %v469
    %v590 = vpack.c.b16 %v474, %v470
    %v591 = vpack.c.b16 %v475, %v471
    %v592 = vpack.c.b16 %v476, %v472
    %v593 = vpack.c.b16 %v481, %v477
    %v594 = vpack.c.b16 %v482, %v478
    %v595 = vpack.c.b16 %v483, %v479
    %v596 = vpack.c.b16 %v484, %v480
    %v597 = vpack.c.b16 %v489, %v485
    %v598 = vpack.c.b16 %v490, %v486
    %v599 = vpack.c.b16 %v491, %v487
    %v600 = vpack.c.b16 %v492, %v488
    %v601 = vpack.c.b16 %v497, %v493
    %v602 = vpack.c.b16 %v498, %v494
    %v603 = vpack.c.b16 %v499, %v495
    %v604 = vpack.c.b16 %v500, %v496
    %v605 = vpack.c.b16 %v505, %v501
    %v606 = vpack.c.b16 %v506, %v502
    %v607 = vpack.c.b16 %v507, %v503
    %v608 = vpack.c.b16 %v508, %v504
    %v609 = vpack.c.b16 %v513, %v509
    %v610 = vpack.c.b16 %v514, %v510
    %v611 = vpack.c.b16 %v515, %v511
    %v612 = vpack.c.b16 %v516, %v512
    %v613 = vpack.c.b16 %v521, %v517
    %v614 = vpack.c.b16 %v522, %v518
    %v615 = vpack.c.b16 %v523, %v519
    %v616 = vpack.c.b16 %v524, %v520
    %v617 = vpack.c.b16 %v529, %v525
    %v618 = vpack.c.b16 %v530, %v526
    %v619 = vpack.c.b16 %v531, %v527
    %v620 = vpack.c.b16 %v532, %v528
    %v621 = vpack.c.b16 %v537, %v533
    %v622 = vpack.c.b16 %v538, %v534
    %v623 = vpack.c.b16 %v539, %v535
    %v624 = vpack.c.b16 %v540, %v536
    %v625 = vpack.c.b16 %v545, %v541
    %v626 = vpack.c.b16 %v546, %v542
    %v627 = vpack.c.b16 %v547, %v543
    %v628 = vpack.c.b16 %v548, %v544
    %v629 = vpack.c.b16 %v553, %v549
    %v630 = vpack.c.b16 %v554, %v550
    %v631 = vpack.c.b16 %v555, %v551
    %v632 = vpack.c.b16 %v556, %v552
    %v633 = vpack.c.b16 %v561, %v557
    %v634 = vpack.c.b16 %v562, %v558
    %v635 = vpack.c.b16 %v563, %v559
    %v636 = vpack.c.b16 %v564, %v560
    %v637 = vpack.c.b16 %v569, %v565
    %v638 = vpack.c.b16 %v570, %v566
    %v639 = vpack.c.b16 %v571, %v567
    %v640 = vpack.c.b16 %v572, %v568
    %v641 = vpack.c.b16 %v577, %v573
    %v642 = vpack.c.b16 %v578, %v574
    %v643 = vpack.c.b16 %v579, %v575
    %v644 = vpack.c.b16 %v580, %v576
    %709 = vmatprep.subr.bf16.mxu0 %v582
    %710 = vmatpush1.bf16.msra.mxu0 %v581
    %711 = vmatprep.subr.bf16.mxu0 %v586
    %712 = vmatpush1.bf16.msra.mxu0 %v585
    %713 = vmatprep.subr.bf16.mxu0 %v590
    %714 = vmatpush1.bf16.msra.mxu0 %v589
    %715 = vmatprep.subr.bf16.mxu0 %v594
    %716 = vmatpush1.bf16.msra.mxu0 %v593
    %717 = vmatprep.subr.bf16.mxu0 %v598
    %718 = vmatpush1.bf16.msra.mxu0 %v597
    %719 = vmatprep.subr.bf16.mxu0 %v602
    %720 = vmatpush1.bf16.msra.mxu0 %v601
    %721 = vmatprep.subr.bf16.mxu0 %v606
    %722 = vmatpush1.bf16.msra.mxu0 %v605
    %723 = vmatprep.subr.bf16.mxu0 %v610
    %724 = vmatpush1.bf16.msra.mxu0 %v609
    %725 = vmatprep.subr.bf16.mxu0 %v614
    %726 = vmatpush1.bf16.msra.mxu0 %v613
    %727 = vmatprep.subr.bf16.mxu0 %v618
    %728 = vmatpush1.bf16.msra.mxu0 %v617
    %729 = vmatprep.subr.bf16.mxu0 %v622
    %730 = vmatpush1.bf16.msra.mxu0 %v621
    %731 = vmatprep.subr.bf16.mxu0 %v626
    %732 = vmatpush1.bf16.msra.mxu0 %v625
    %733 = vmatprep.subr.bf16.mxu0 %v630
    %734 = vmatpush1.bf16.msra.mxu0 %v629
    %735 = vmatprep.subr.bf16.mxu0 %v634
    %736 = vmatpush1.bf16.msra.mxu0 %v633
    %737 = vmatprep.subr.bf16.mxu0 %v638
    %738 = vmatpush1.bf16.msra.mxu0 %v637
    %739 = vmatprep.subr.bf16.mxu0 %v642
    %740 = vmatpush1.bf16.msra.mxu0 %v641
    %741 = vmatprep.mubr.bf16.mxu0 %v302
    %742 = vmatmul.mubr.bf16.gmra.mrb[0].mxu0 %v301
    %v743 = vpop.f32.mrb[0].mxu0
    %v744 = vadd.f32 %v372, %v743
    %v745 = vpop.f32.mrb[0].mxu0
    %v746 = vadd.f32 %v376, %v745
    %v747 = vpop.f32.mrb[0].mxu0
    %v748 = vpop.f32.mrb[0].mxu0
    %749 = vdwg.mxu0
    %750 = vmatprep.subr.bf16.mxu0 %v584
    %751 = vmatpush1.bf16.msra.mxu0 %v583
    %752 = vmatprep.subr.bf16.mxu0 %v588
    %753 = vmatpush1.bf16.msra.mxu0 %v587
    %754 = vmatprep.subr.bf16.mxu0 %v592
    %755 = vmatpush1.bf16.msra.mxu0 %v591
    %756 = vmatprep.subr.bf16.mxu0 %v596
    %757 = vmatpush1.bf16.msra.mxu0 %v595
    %758 = vmatprep.subr.bf16.mxu0 %v600
    %759 = vmatpush1.bf16.msra.mxu0 %v599
    %760 = vmatprep.subr.bf16.mxu0 %v604
    %761 = vmatpush1.bf16.msra.mxu0 %v603
    %762 = vmatprep.subr.bf16.mxu0 %v608
    %763 = vmatpush1.bf16.msra.mxu0 %v607
    %764 = vmatprep.subr.bf16.mxu0 %v612
    %765 = vmatpush1.bf16.msra.mxu0 %v611
    %766 = vmatprep.subr.bf16.mxu0 %v616
    %767 = vmatpush1.bf16.msra.mxu0 %v615
    %768 = vmatprep.subr.bf16.mxu0 %v620
    %769 = vmatpush1.bf16.msra.mxu0 %v619
    %770 = vmatprep.subr.bf16.mxu0 %v624
    %771 = vmatpush1.bf16.msra.mxu0 %v623
    %772 = vmatprep.subr.bf16.mxu0 %v628
    %773 = vmatpush1.bf16.msra.mxu0 %v627
    %774 = vmatprep.subr.bf16.mxu0 %v632
    %775 = vmatpush1.bf16.msra.mxu0 %v631
    %776 = vmatprep.subr.bf16.mxu0 %v636
    %777 = vmatpush1.bf16.msra.mxu0 %v635
    %778 = vmatprep.subr.bf16.mxu0 %v640
    %779 = vmatpush1.bf16.msra.mxu0 %v639
    %780 = vmatprep.subr.bf16.mxu0 %v644
    %781 = vmatpush1.bf16.msra.mxu0 %v643
    %782 = vmatprep.mubr.bf16.mxu0 %v302
    %783 = vmatmul.mubr.bf16.gmra.mrb[0].mxu0 %v301
    %v784 = vpop.f32.mrb[0].mxu0
    %v785 = vadd.f32 %v380, %v784
    %v786 = vpop.f32.mrb[0].mxu0
    %v787 = vadd.f32 %v384, %v786
    %v788 = vpop.f32.mrb[0].mxu0
    %v789 = vpop.f32.mrb[0].mxu0
    %790 = vdwg.mxu0
    %v791 = vmax.f32 %v744, 0.0
    %v792 = vmax.f32 %v746, 0.0
    %v793 = vmax.f32 %v785, 0.0
    %v794 = vmax.f32 %v787, 0.0
    %v795 = vpack.c.bf16 %v791, %v791
    %v796 = vpack.c.bf16 %v792, %v792
    %v797 = vpack.c.bf16 %v793, %v793
    %v798 = vpack.c.bf16 %v794, %v794
    %v799 = vld [vmem:[#allocation8] sm:$0xf]
    %v800 = vld [vmem:[#allocation8 + $0x4] sm:$0xf]
    %v801 = vld [vmem:[#allocation8 + $0x8] sm:$0xf]
    %v802 = vld [vmem:[#allocation8 + $0xc] sm:$0xf]
    %v803 = vld [vmem:[#allocation8 + $0x10] sm:$0xf]
    %v804 = vld [vmem:[#allocation8 + $0x14] sm:$0xf]
    %v805 = vld [vmem:[#allocation8 + $0x18] sm:$0xf]
    %v806 = vld [vmem:[#allocation8 + $0x1c] sm:$0xf]
    %v807 = vld [vmem:[#allocation8 + $0x20] sm:$0xf]
    %v808 = vld [vmem:[#allocation8 + $0x24] sm:$0xf]
    %v809 = vld [vmem:[#allocation8 + $0x28] sm:$0xf]
    %v810 = vld [vmem:[#allocation8 + $0x2c] sm:$0xf]
    %v811 = vld [vmem:[#allocation8 + $0x30] sm:$0xf]
    %v812 = vld [vmem:[#allocation8 + $0x34] sm:$0xf]
    %v813 = vld [vmem:[#allocation8 + $0x38] sm:$0xf]
    %v814 = vld [vmem:[#allocation8 + $0x3c] sm:$0xf]
    %v815 = vld [vmem:[#allocation8 + $0x40] sm:$0xf]
    %v816 = vld [vmem:[#allocation8 + $0x44] sm:$0xf]
    %v817 = vld [vmem:[#allocation8 + $0x48] sm:$0xf]
    %v818 = vld [vmem:[#allocation8 + $0x4c] sm:$0xf]
    %v819 = vld [vmem:[#allocation8 + $0x50] sm:$0xf]
    %v820 = vld [vmem:[#allocation8 + $0x54] sm:$0xf]
    %v821 = vld [vmem:[#allocation8 + $0x58] sm:$0xf]
    %v822 = vld [vmem:[#allocation8 + $0x5c] sm:$0xf]
    %v823 = vld [vmem:[#allocation8 + $0x60] sm:$0xf]
    %v824 = vld [vmem:[#allocation8 + $0x64] sm:$0xf]
    %v825 = vld [vmem:[#allocation8 + $0x68] sm:$0xf]
    %v826 = vld [vmem:[#allocation8 + $0x6c] sm:$0xf]
    %v827 = vld [vmem:[#allocation8 + $0x70] sm:$0xf]
    %v828 = vld [vmem:[#allocation8 + $0x74] sm:$0xf]
    %v829 = vld [vmem:[#allocation8 + $0x78] sm:$0xf]
    %v830 = vld [vmem:[#allocation8 + $0x7c] sm:$0xf]
    %v831 = vld [vmem:[#allocation8 + $0x80] sm:$0xf]
    %v832 = vld [vmem:[#allocation8 + $0x84] sm:$0xf]
    %v833 = vld [vmem:[#allocation8 + $0x88] sm:$0xf]
    %v834 = vld [vmem:[#allocation8 + $0x8c] sm:$0xf]
    %v835 = vld [vmem:[#allocation8 + $0x90] sm:$0xf]
    %v836 = vld [vmem:[#allocation8 + $0x94] sm:$0xf]
    %v837 = vld [vmem:[#allocation8 + $0x98] sm:$0xf]
    %v838 = vld [vmem:[#allocation8 + $0x9c] sm:$0xf]
    %v839 = vld [vmem:[#allocation8 + $0xa0] sm:$0xf]
    %v840 = vld [vmem:[#allocation8 + $0xa4] sm:$0xf]
    %v841 = vld [vmem:[#allocation8 + $0xa8] sm:$0xf]
    %v842 = vld [vmem:[#allocation8 + $0xac] sm:$0xf]
    %v843 = vld [vmem:[#allocation8 + $0xb0] sm:$0xf]
    %v844 = vld [vmem:[#allocation8 + $0xb4] sm:$0xf]
    %v845 = vld [vmem:[#allocation8 + $0xb8] sm:$0xf]
    %v846 = vld [vmem:[#allocation8 + $0xbc] sm:$0xf]
    %v847 = vld [vmem:[#allocation8 + $0xc0] sm:$0xf]
    %v848 = vld [vmem:[#allocation8 + $0xc4] sm:$0xf]
    %v849 = vld [vmem:[#allocation8 + $0xc8] sm:$0xf]
    %v850 = vld [vmem:[#allocation8 + $0xcc] sm:$0xf]
    %v851 = vld [vmem:[#allocation8 + $0xd0] sm:$0xf]
    %v852 = vld [vmem:[#allocation8 + $0xd4] sm:$0xf]
    %v853 = vld [vmem:[#allocation8 + $0xd8] sm:$0xf]
    %v854 = vld [vmem:[#allocation8 + $0xdc] sm:$0xf]
    %v855 = vld [vmem:[#allocation8 + $0xe0] sm:$0xf]
    %v856 = vld [vmem:[#allocation8 + $0xe4] sm:$0xf]
    %v857 = vld [vmem:[#allocation8 + $0xe8] sm:$0xf]
    %v858 = vld [vmem:[#allocation8 + $0xec] sm:$0xf]
    %v859 = vld [vmem:[#allocation8 + $0xf0] sm:$0xf]
    %v860 = vld [vmem:[#allocation8 + $0xf4] sm:$0xf]
    %v861 = vld [vmem:[#allocation8 + $0xf8] sm:$0xf]
    %v862 = vld [vmem:[#allocation8 + $0xfc] sm:$0xf]
    %v863 = vld [vmem:[%s6] sm:$0x1]
    %v865 = vlaneseq
    %v866 = vshrl.u32 %v865, 7
    %v867 = vsub.s32 0, %v866
    %v868 = vrot.slane %v863, %v867
    %v934 = vunpack.c.l.b16 %v799
    %v935 = vunpack.c.l.b16 %v800
    %v936 = vunpack.c.l.b16 %v801
    %v937 = vunpack.c.l.b16 %v802
    %v938 = vunpack.c.l.b16 %v803
    %v939 = vunpack.c.l.b16 %v804
    %v940 = vunpack.c.l.b16 %v805
    %v941 = vunpack.c.l.b16 %v806
    %v942 = vunpack.c.l.b16 %v807
    %v943 = vunpack.c.l.b16 %v808
    %v944 = vunpack.c.l.b16 %v809
    %v945 = vunpack.c.l.b16 %v810
    %v946 = vunpack.c.l.b16 %v811
    %v947 = vunpack.c.l.b16 %v812
    %v948 = vunpack.c.l.b16 %v813
    %v949 = vunpack.c.l.b16 %v814
    %v950 = vunpack.c.l.b16 %v815
    %v951 = vunpack.c.l.b16 %v816
    %v952 = vunpack.c.l.b16 %v817
    %v953 = vunpack.c.l.b16 %v818
    %v954 = vunpack.c.l.b16 %v819
    %v955 = vunpack.c.l.b16 %v820
    %v956 = vunpack.c.l.b16 %v821
    %v957 = vunpack.c.l.b16 %v822
    %v958 = vunpack.c.l.b16 %v823
    %v959 = vunpack.c.l.b16 %v824
    %v960 = vunpack.c.l.b16 %v825
    %v961 = vunpack.c.l.b16 %v826
    %v962 = vunpack.c.l.b16 %v827
    %v963 = vunpack.c.l.b16 %v828
    %v964 = vunpack.c.l.b16 %v829
    %v965 = vunpack.c.l.b16 %v830
    %v966 = vunpack.c.l.b16 %v831
    %v967 = vunpack.c.l.b16 %v832
    %v968 = vunpack.c.l.b16 %v833
    %v969 = vunpack.c.l.b16 %v834
    %v970 = vunpack.c.l.b16 %v835
    %v971 = vunpack.c.l.b16 %v836
    %v972 = vunpack.c.l.b16 %v837
    %v973 = vunpack.c.l.b16 %v838
    %v974 = vunpack.c.l.b16 %v839
    %v975 = vunpack.c.l.b16 %v840
    %v976 = vunpack.c.l.b16 %v841
    %v977 = vunpack.c.l.b16 %v842
    %v978 = vunpack.c.l.b16 %v843
    %v979 = vunpack.c.l.b16 %v844
    %v980 = vunpack.c.l.b16 %v845
    %v981 = vunpack.c.l.b16 %v846
    %v982 = vunpack.c.l.b16 %v847
    %v983 = vunpack.c.l.b16 %v848
    %v984 = vunpack.c.l.b16 %v849
    %v985 = vunpack.c.l.b16 %v850
    %v986 = vunpack.c.l.b16 %v851
    %v987 = vunpack.c.l.b16 %v852
    %v988 = vunpack.c.l.b16 %v853
    %v989 = vunpack.c.l.b16 %v854
    %v990 = vunpack.c.l.b16 %v855
    %v991 = vunpack.c.l.b16 %v856
    %v992 = vunpack.c.l.b16 %v857
    %v993 = vunpack.c.l.b16 %v858
    %v994 = vunpack.c.l.b16 %v859
    %v995 = vunpack.c.l.b16 %v860
    %v996 = vunpack.c.l.b16 %v861
    %v997 = vunpack.c.l.b16 %v862
    %v998 = vpack.c.b16 %v935, %v934
    %v999 = vpack.c.b16 %v937, %v936
    %v1000 = vpack.c.b16 %v939, %v938
    %v1001 = vpack.c.b16 %v941, %v940
    %v1002 = vpack.c.b16 %v943, %v942
    %v1003 = vpack.c.b16 %v945, %v944
    %v1004 = vpack.c.b16 %v947, %v946
    %v1005 = vpack.c.b16 %v949, %v948
    %v1006 = vpack.c.b16 %v951, %v950
    %v1007 = vpack.c.b16 %v953, %v952
    %v1008 = vpack.c.b16 %v955, %v954
    %v1009 = vpack.c.b16 %v957, %v956
    %v1010 = vpack.c.b16 %v959, %v958
    %v1011 = vpack.c.b16 %v961, %v960
    %v1012 = vpack.c.b16 %v963, %v962
    %v1013 = vpack.c.b16 %v965, %v964
    %v1014 = vpack.c.b16 %v967, %v966
    %v1015 = vpack.c.b16 %v969, %v968
    %v1016 = vpack.c.b16 %v971, %v970
    %v1017 = vpack.c.b16 %v973, %v972
    %v1018 = vpack.c.b16 %v975, %v974
    %v1019 = vpack.c.b16 %v977, %v976
    %v1020 = vpack.c.b16 %v979, %v978
    %v1021 = vpack.c.b16 %v981, %v980
    %v1022 = vpack.c.b16 %v983, %v982
    %v1023 = vpack.c.b16 %v985, %v984
    %v1024 = vpack.c.b16 %v987, %v986
    %v1025 = vpack.c.b16 %v989, %v988
    %v1026 = vpack.c.b16 %v991, %v990
    %v1027 = vpack.c.b16 %v993, %v992
    %v1028 = vpack.c.b16 %v995, %v994
    %v1029 = vpack.c.b16 %v997, %v996
    %1062 = vmatprep.subr.bf16.mxu0 0
    %1063 = vmatpush1.bf16.msra.mxu0 %v998
    %1064 = vmatprep.subr.bf16.mxu0 0
    %1065 = vmatpush1.bf16.msra.mxu0 %v999
    %1066 = vmatprep.subr.bf16.mxu0 0
    %1067 = vmatpush1.bf16.msra.mxu0 %v1000
    %1068 = vmatprep.subr.bf16.mxu0 0
    %1069 = vmatpush1.bf16.msra.mxu0 %v1001
    %1070 = vmatprep.subr.bf16.mxu0 0
    %1071 = vmatpush1.bf16.msra.mxu0 %v1002
    %1072 = vmatprep.subr.bf16.mxu0 0
    %1073 = vmatpush1.bf16.msra.mxu0 %v1003
    %1074 = vmatprep.subr.bf16.mxu0 0
    %1075 = vmatpush1.bf16.msra.mxu0 %v1004
    %1076 = vmatprep.subr.bf16.mxu0 0
    %1077 = vmatpush1.bf16.msra.mxu0 %v1005
    %1078 = vmatprep.subr.bf16.mxu0 0
    %1079 = vmatpush1.bf16.msra.mxu0 %v1006
    %1080 = vmatprep.subr.bf16.mxu0 0
    %1081 = vmatpush1.bf16.msra.mxu0 %v1007
    %1082 = vmatprep.subr.bf16.mxu0 0
    %1083 = vmatpush1.bf16.msra.mxu0 %v1008
    %1084 = vmatprep.subr.bf16.mxu0 0
    %1085 = vmatpush1.bf16.msra.mxu0 %v1009
    %1086 = vmatprep.subr.bf16.mxu0 0
    %1087 = vmatpush1.bf16.msra.mxu0 %v1010
    %1088 = vmatprep.subr.bf16.mxu0 0
    %1089 = vmatpush1.bf16.msra.mxu0 %v1011
    %1090 = vmatprep.subr.bf16.mxu0 0
    %1091 = vmatpush1.bf16.msra.mxu0 %v1012
    %1092 = vmatprep.subr.bf16.mxu0 0
    %1093 = vmatpush1.bf16.msra.mxu0 %v1013
    %1094 = vmatprep.mubr.bf16.mxu0 %v796
    %1095 = vmatmul.mubr.bf16.gmra.mrb[0].mxu0 %v795
    %v1096 = vpop.f32.mrb[0].mxu0
    %v1097 = vadd.f32 %v868, %v1096
    %v1098 = vpop.f32.mrb[0].mxu0
    %v1099 = vpop.f32.mrb[0].mxu0
    %v1100 = vpop.f32.mrb[0].mxu0
    %1101 = vdwg.mxu0
    %1102 = vmatprep.subr.bf16.mxu0 0
    %1103 = vmatpush1.bf16.msra.mxu0 %v1014
    %1104 = vmatprep.subr.bf16.mxu0 0
    %1105 = vmatpush1.bf16.msra.mxu0 %v1015
    %1106 = vmatprep.subr.bf16.mxu0 0
    %1107 = vmatpush1.bf16.msra.mxu0 %v1016
    %1108 = vmatprep.subr.bf16.mxu0 0
    %1109 = vmatpush1.bf16.msra.mxu0 %v1017
    %1110 = vmatprep.subr.bf16.mxu0 0
    %1111 = vmatpush1.bf16.msra.mxu0 %v1018
    %1112 = vmatprep.subr.bf16.mxu0 0
    %1113 = vmatpush1.bf16.msra.mxu0 %v1019
    %1114 = vmatprep.subr.bf16.mxu0 0
    %1115 = vmatpush1.bf16.msra.mxu0 %v1020
    %1116 = vmatprep.subr.bf16.mxu0 0
    %1117 = vmatpush1.bf16.msra.mxu0 %v1021
    %1118 = vmatprep.subr.bf16.mxu0 0
    %1119 = vmatpush1.bf16.msra.mxu0 %v1022
    %1120 = vmatprep.subr.bf16.mxu0 0
    %1121 = vmatpush1.bf16.msra.mxu0 %v1023
    %1122 = vmatprep.subr.bf16.mxu0 0
    %1123 = vmatpush1.bf16.msra.mxu0 %v1024
    %1124 = vmatprep.subr.bf16.mxu0 0
    %1125 = vmatpush1.bf16.msra.mxu0 %v1025
    %1126 = vmatprep.subr.bf16.mxu0 0
    %1127 = vmatpush1.bf16.msra.mxu0 %v1026
    %1128 = vmatprep.subr.bf16.mxu0 0
    %1129 = vmatpush1.bf16.msra.mxu0 %v1027
    %1130 = vmatprep.subr.bf16.mxu0 0
    %1131 = vmatpush1.bf16.msra.mxu0 %v1028
    %1132 = vmatprep.subr.bf16.mxu0 0
    %1133 = vmatpush1.bf16.msra.mxu0 %v1029
    %1134 = vmatprep.mubr.bf16.mxu0 %v798
    %1135 = vmatmul.mubr.bf16.gmra.mrb[0].mxu0 %v797
    %v1136 = vpop.f32.mrb[0].mxu0
    %v1137 = vadd.f32 %v1097, %v1136
    %v1138 = vpop.f32.mrb[0].mxu0
    %v1139 = vpop.f32.mrb[0].mxu0
    %v1140 = vpop.f32.mrb[0].mxu0
    %1141 = vdwg.mxu0
    %1142 = vst [vmem:[#allocation10] sm:$0xff] %v1137
    // Predicated region
    $region46: #{tpu_custom_call.1} parent=1 // pred_check
      _
    $region47: #{tpu_custom_call.1} parent=1 // pred_check_branch
      %1144 = sbr.rel (0) target = $region49
    $region48: #{tpu_custom_call.1} parent=1 // pred_region
      %s1146 = ssub.s32 128, 128
      %1147 = vsyncadd [#allocation4], %s1146
      %s1149 = sshll.u32 [#allocation10], 4
      %s1150 = int_to_ptr.vmem [resolvable:$true] %s1149
      %1152 = dma.vmem_to_hbm [thread:$0]  %s1150, 128, %s7, [#allocation4]
    $region49: #{tpu_custom_call.1} parent=1 // pred_fallthru
      _
    // Predicated region
    $region50: #{tpu_custom_call.1} parent=1 // pred_check
      _
    $region51: #{tpu_custom_call.1} parent=1 // pred_check_branch
      %1154 = sbr.rel (0) target = $region53
    $region52: #{tpu_custom_call.1} parent=1 // pred_region
      %1155 = dma.done [#allocation4], 128
    $region53: #{tpu_custom_call.1} parent=1 // pred_fallthru
      _
    %1156 = vsyncpa [#allocation3], 1
    %1157 = vsyncpa [#allocation6], 1
    %1158 = vsyncpa [#allocation9], 1
    %1159 = vsyncpa [#allocation4], 1

</llo_original>
